<compile_context>
chip_gen: v7x
topology: tpu7x:2x2x1
jax: 0.10.0
libtpu: 0.0.40
codegen_flags: <defaults>
</compile_context>

<pallas_src>
import jax
import jax.numpy as jnp
from jax import lax
from jax.experimental import pallas as pl
from jax.experimental.pallas import tpu as pltpu

# ----------------------- synthetic config (module __init__) -----------------
NUM_JOINTS = 15                     # flip_pairs reference joints 0..14
J_PAD = 16                          # joint dim padded to 16 for full-vreg stores
IMG_H, IMG_W = 16, 16               # config.MODEL.IMAGE_SIZE (small)
HM_H, HM_W = 16, 16                 # heatmap spatial size (== image size here)
C_IN = 3                            # RGB input
C_MID = 16                          # conv hidden channels
HIDDEN = 64                         # 3D lifter hidden width
CENTER = (320.0, 240.0)             # CAMERA_TYPE == 'vga'
SCALE = (3.2, 2.4)
OUTPUT_3D_WORLD = False
# TODO(synk): camera_to_world (transform_camera_to_world with R, T) is skipped
# because output_3d_world=False and R/T conventions are not defined in-source.

# padded-row geometry for the shifted-slab / im2col conv
WP = HM_W + 2                       # 18: padded heatmap row width
SW = HM_H * WP                      # 288: slab width == padded heatmap size
XROW = (IMG_H + 3) * (IMG_W + 2)    # 342: flattened padded-input row length
K27 = 9 * C_IN                      # 27: im2col contraction dim

# (q*57)>>10 == q//18 is only exact for q < ~512; SW must stay well below that.
assert SW <= 504, "q//18 mul-shift trick invalid for this heatmap geometry"

# transform_preds with rotation = 0 (inverse affine from heatmap -> image coords)
FX = SCALE[0] * 200.0 / HM_W
FY = SCALE[1] * 200.0 / HM_H
OX = CENTER[0] - SCALE[0] * 100.0
OY = CENTER[1] - SCALE[1] * 100.0

# packed small-output layout (lanes): [px 0:15 | py 15:30 | maxv 30:45 | p3d 45:90 | pad]
PACK_W = 128

VMEM_SPEC = pl.BlockSpec(memory_space=pltpu.MemorySpace.VMEM)


# ------------------------------- fused Pallas kernel -------------------------
def hpe_fused_kernel(xc_ref, conv_ref, wb_ref, hm_ref, out_ref):
    n_img = hm_ref.shape[0]
    j = NUM_JOINTS

    # ---- conv weights, sliced ONCE (hoisted out of the per-image loop) ------
    cp = conv_ref[...]                                               # (32, 28)
    w1 = lax.slice(cp, (0, 0), (C_MID, K27))                         # (16, 27)
    b1 = lax.slice(cp, (0, K27), (C_MID, K27 + 1))                   # (16, 1)
    w2 = lax.slice(cp, (C_MID, 0), (C_MID + J_PAD, C_MID))           # (16, 16) (row 15 = 0)
    b2 = lax.slice(cp, (C_MID, C_MID), (C_MID + J_PAD, C_MID + 1))   # (16, 1)

    # ---- hoisted iota / scatter constants ------------------------------------
    q_iota = lax.broadcasted_iota(jnp.int32, (J_PAD, SW), 1)
    yc = jnp.right_shift(q_iota * 57, 10)                            # q // 18 (exact, q<512)
    xc = q_iota - yc * WP                                            # q % 18
    valid = xc < HM_W                                                # mask padded columns
    q_f = q_iota.astype(jnp.float32)
    bigq = jnp.float32(2 * SW)

    # scatter matrices: drop px/py/maxv columns straight into packed lanes 0..44
    lane45 = lax.broadcasted_iota(jnp.int32, (j, 3 * j), 1)
    sub45 = lax.broadcasted_iota(jnp.int32, (j, 3 * j), 0)
    sx = (lane45 == sub45).astype(jnp.float32)
    sy = (lane45 == sub45 + j).astype(jnp.float32)
    sm = (lane45 == sub45 + 2 * j).astype(jnp.float32)

    rows = []
    # TODO(synk): for large batch use a grid over images instead of this unroll.
    for n in range(n_img):
        # ---- model_2d: single K=27 matmul (im2col done in wrapper) + ReLU + 1x1
        patches = xc_ref[n, :, :]                                    # (27, 288)
        h = jnp.maximum(
            jnp.dot(w1, patches, preferred_element_type=jnp.float32) + b1, 0.0)   # (16, 288)
        hm = jnp.dot(w2, h, preferred_element_type=jnp.float32) + b2              # (16, 288)
        hm_ref[n, :, :] = hm          # full 16-sublane, lane-dense store; wrapper crops

        # ---- get_final_preds: per-joint argmax + maxvals + affine -------------
        mhm = jnp.where(valid, hm, -jnp.inf)
        maxv16 = jnp.max(mhm, axis=1, keepdims=True)                 # (16, 1)
        # first-occurrence argmax in raster order (matches np.argmax)
        qidx_f = jnp.min(jnp.where(mhm == maxv16, q_f, bigq), axis=1, keepdims=True)
        qidx = qidx_f.astype(jnp.int32)                              # (16, 1)
        pyi = jnp.right_shift(qidx * 57, 10)                         # q // 18
        pxi = qidx - pyi * WP                                        # q % 18

        maxv = lax.slice(maxv16, (0, 0), (j, 1))                     # (15, 1)
        mask = (maxv > 0.0).astype(jnp.float32)
        px = lax.slice(pxi, (0, 0), (j, 1)).astype(jnp.float32) * mask
        py = lax.slice(pyi, (0, 0), (j, 1)).astype(jnp.float32) * mask
        # TODO(synk): config.TEST.POST_PROCESS 0.25-pixel shift omitted (config not given).
        px = px * FX + OX                                            # transform_preds
        py = py * FY + OY

        # one scatter + one sublane reduction -> packed lanes [px | py | maxv]
        rows.append(jnp.sum(px * sx + py * sy + maxv * sm, axis=0, keepdims=True))  # (1, 45)

    small = jnp.concatenate(rows, axis=0)                            # (N, 45)
    x2d = lax.slice(small, (0, 0), (n_img, 2 * j))                   # (N, 30) [x..., y...]

    # ---- model_3d: normalize_pose -> MLP lifter (BN folded, eval) -> unnormalize --
    lw1 = wb_ref[pl.ds(0, 2 * j), :]                                 # (30, 64)
    lw2 = wb_ref[pl.ds(32, HIDDEN), :]                               # (64, 64)
    lw3 = wb_ref[pl.ds(32 + HIDDEN, HIDDEN), :]                      # (64, 64)
    lwo = wb_ref[pl.ds(32 + 2 * HIDDEN, HIDDEN), :]                  # (64, 64)
    vec = wb_ref[pl.ds(32 + 3 * HIDDEN, 8), :]                       # (8, 64)
    lb1 = lax.slice(vec, (0, 0), (1, HIDDEN))
    lb2 = lax.slice(vec, (1, 0), (2, HIDDEN))
    lb3 = lax.slice(vec, (2, 0), (3, HIDDEN))
    lbo = lax.slice(vec, (3, 0), (4, HIDDEN))
    m3d = lax.slice(vec, (4, 0), (5, 3 * j))
    s3d = lax.slice(vec, (5, 0), (6, 3 * j))
    m2d = lax.slice(vec, (6, 0), (7, 2 * j))
    s2d = lax.slice(vec, (7, 0), (8, 2 * j))

    xn = (x2d - m2d) / (s2d + 1e-8)
    h1 = jnp.maximum(jnp.dot(xn, lw1, preferred_element_type=jnp.float32) + lb1, 0.0)
    r = jnp.maximum(jnp.dot(h1, lw2, preferred_element_type=jnp.float32) + lb2, 0.0)
    r = jnp.maximum(jnp.dot(r, lw3, preferred_element_type=jnp.float32) + lb3, 0.0)
    h1 = h1 + r                                                      # residual
    y = jnp.dot(h1, lwo, preferred_element_type=jnp.float32) + lbo   # (N, 64)
    p3d = lax.slice(y, (0, 0), (n_img, 3 * j)) * s3d + m3d           # (N, 45)

    # single lane-dense packed store: [px|py|maxv|p3d|pad] -> (N, 128)
    pad = jnp.zeros((n_img, PACK_W - 6 * j), jnp.float32)
    out_ref[...] = jnp.concatenate([small, p3d, pad], axis=1)


# ------------------------------ weight packing (one-time) --------------------
def _row(v, fill=0.0):
    v = v.reshape(1, -1)
    return jnp.pad(v, ((0, 0), (0, HIDDEN - v.shape[1])), constant_values=fill)


def pack_params(params, stats):
    """One-time packing of weights/stats into 2 VMEM-friendly buffers."""
    # conv pack (32, 28): rows 0:16 = [w1 (16,27) | b1], rows 16:32 = [w2_16 | b2_16 | pad]
    w1_27 = params["conv1_w"].transpose(0, 2, 3, 1).reshape(C_MID, K27)          # tap-major
    top = jnp.concatenate([w1_27, params["conv1_b"].reshape(C_MID, 1)], axis=1)  # (16, 28)
    w2_16 = jnp.pad(params["conv2_w"].reshape(NUM_JOINTS, C_MID),
                    ((0, J_PAD - NUM_JOINTS), (0, 0)))                           # (16, 16)
    b2_16 = jnp.pad(params["conv2_b"].reshape(NUM_JOINTS, 1),
                    ((0, J_PAD - NUM_JOINTS), (0, 0)))                           # (16, 1)
    bot = jnp.concatenate([w2_16, b2_16], axis=1)
    bot = jnp.pad(bot, ((0, 0), (0, top.shape[1] - bot.shape[1])))               # (16, 28)
    conv_pack = jnp.concatenate([top, bot], axis=0)                              # (32, 28)

    # lifter w1 rows permuted to the kernel's de-interleaved [x..., y...] input order
    lw1_de = params["w1"].reshape(NUM_JOINTS, 2, HIDDEN).transpose(1, 0, 2)
    lw1_de = lw1_de.reshape(2 * NUM_JOINTS, HIDDEN)                              # (30, 64)
    wo_pad = jnp.pad(params["wo"], ((0, 0), (0, HIDDEN - 3 * NUM_JOINTS)))       # (64, 64)
    wb_pack = jnp.concatenate([
        jnp.pad(lw1_de, ((0, 2), (0, 0))),       # rows   0: 32  (lifter w1, padded)
        params["w2"],                            # rows  32: 96
        params["w3"],                            # rows  96:160
        wo_pad,                                  # rows 160:224
        _row(params["b1"]), _row(params["b2"]), _row(params["b3"]), _row(params["bo"]),
        _row(stats["mean_3d"]),                  # (1, 45) flattened (joint, xyz)
        _row(stats["std_3d"], fill=1.0),
        _row(stats["mean_2d"].T),                # de-interleaved (x0..x14, y0..y14)
        _row(stats["std_2d"].T, fill=1.0),
    ], axis=0)                                   # (232, 64)
    return {"conv_pack": conv_pack, "wb_pack": wb_pack}


# ------------------------------ JAX wrapper -----------------------------------
@jax.jit
def hpe_net_forward(x, packed):
    """Returns (heatmap, preds_2d, preds_3d, maxvals) like HPE_NET.forward."""
    n = x.shape[0]
    # Pad H by (1, 2) and W by (1, 1): every 288-wide lane slab (max offset 38)
    # then stays inside the flattened 342-lane row.
    xp = jnp.pad(x, ((0, 0), (0, 0), (1, 2), (1, 1))).reshape(n, C_IN, XROW)
    # im2col in XLA (tap-major, channel-minor rows): turns the 3x3 conv into a
    # single K=27 matmul per image inside the kernel. ~31 KB/img extra HBM.
    slabs = []
    for dy in range(3):
        for dx in range(3):
            s = dy * WP + dx
            slabs.append(lax.slice(xp, (0, 0, s), (n, C_IN, s + SW)))
    x_cols = jnp.stack(slabs, axis=1).reshape(n, K27, SW)            # (N, 27, 288)

    hm_pad, out_pack = pl.pallas_call(
        hpe_fused_kernel,
        out_shape=(
            jax.ShapeDtypeStruct((n, J_PAD, SW), jnp.float32),       # padded heatmap
            jax.ShapeDtypeStruct((n, PACK_W), jnp.float32),          # packed small outputs
        ),
        in_specs=[VMEM_SPEC] * 3,
        out_specs=(VMEM_SPEC, VMEM_SPEC),
    )(x_cols, packed["conv_pack"], packed["wb_pack"])

    # TODO(synk): at large batch, consumers could accept the padded (J_PAD,16,18)
    # heatmap layout directly and skip this crop (saves an HBM round trip).
    heatmap = hm_pad.reshape(n, J_PAD, HM_H, WP)[:, :NUM_JOINTS, :, :HM_W]
    preds_2d = jnp.stack([out_pack[:, 0:NUM_JOINTS],
                          out_pack[:, NUM_JOINTS:2 * NUM_JOINTS]], axis=-1)
    maxvals = out_pack[:, 2 * NUM_JOINTS:3 * NUM_JOINTS].reshape(n, NUM_JOINTS, 1)
    preds_3d = out_pack[:, 3 * NUM_JOINTS:6 * NUM_JOINTS].reshape(n, NUM_JOINTS, 3)
    if OUTPUT_3D_WORLD:
        pass  # TODO(synk): camera_to_world needs R/T + transform_camera_to_world def.
    return heatmap, preds_2d, preds_3d, maxvals


# --------------------------- deterministic params ----------------------------
def init_params_and_stats(key):
    ks = jax.random.split(key, 16)
    s = 0.1
    params = {
        "conv1_w": s * jax.random.normal(ks[0], (C_MID, C_IN, 3, 3), jnp.float32),
        "conv1_b": s * jax.random.normal(ks[1], (C_MID,), jnp.float32),
        "conv2_w": s * jax.random.normal(ks[2], (NUM_JOINTS, C_MID, 1, 1), jnp.float32),
        "conv2_b": s * jax.random.normal(ks[3], (NUM_JOINTS,), jnp.float32),
        "w1": s * jax.random.normal(ks[4], (NUM_JOINTS * 2, HIDDEN), jnp.float32),
        "b1": s * jax.random.normal(ks[5], (1, HIDDEN), jnp.float32),
        "w2": s * jax.random.normal(ks[6], (HIDDEN, HIDDEN), jnp.float32),
        "b2": s * jax.random.normal(ks[7], (1, HIDDEN), jnp.float32),
        "w3": s * jax.random.normal(ks[8], (HIDDEN, HIDDEN), jnp.float32),
        "b3": s * jax.random.normal(ks[9], (1, HIDDEN), jnp.float32),
        "wo": s * jax.random.normal(ks[10], (HIDDEN, NUM_JOINTS * 3), jnp.float32),
        "bo": s * jax.random.normal(ks[11], (1, NUM_JOINTS * 3), jnp.float32),
    }
    stats = {
        "mean_2d": 100.0 * jax.random.normal(ks[12], (NUM_JOINTS, 2), jnp.float32),
        "std_2d": 50.0 * jnp.abs(jax.random.normal(ks[13], (NUM_JOINTS, 2),
                                                   jnp.float32)) + 1.0,
        "mean_3d": 10.0 * jax.random.normal(ks[14], (NUM_JOINTS, 3), jnp.float32),
        "std_3d": 5.0 * jnp.abs(jax.random.normal(ks[15], (NUM_JOINTS, 3),
                                                  jnp.float32)) + 0.5,
    }
    return params, stats


if __name__ == "__main__":
    key = jax.random.PRNGKey(0)
    k_x, k_p = jax.random.split(key)
    x = jax.random.normal(k_x, (2, C_IN, IMG_H, IMG_W), jnp.float32)   # NCHW
    params, stats = init_params_and_stats(k_p)
    packed = pack_params(params, stats)        # weight prep, once (not per call)

    heatmap, preds_2d, preds_3d, maxvals = hpe_net_forward(x, packed)
    jax.block_until_ready((heatmap, preds_2d, preds_3d, maxvals))

    assert heatmap.shape == (2, NUM_JOINTS, HM_H, HM_W)
    assert preds_2d.shape == (2, NUM_JOINTS, 2)
    assert preds_3d.shape == (2, NUM_JOINTS, 3)
    assert maxvals.shape == (2, NUM_JOINTS, 1)
    assert bool(jnp.all(jnp.isfinite(preds_3d)))
    print("KERNEL_OK")
</pallas_src>

<mosaic_0001>
module attributes {stable_mosaic.version = 11 : i64} {
  func.func @hpe_fused_kernel(%arg0: memref<2x27x288xf32, #tpu.memory_space<vmem>>, %arg1: memref<32x28xf32, #tpu.memory_space<vmem>>, %arg2: memref<232x64xf32, #tpu.memory_space<vmem>>, %arg3: memref<2x16x288xf32, #tpu.memory_space<vmem>>, %arg4: memref<2x128xf32, #tpu.memory_space<vmem>>) attributes {dimension_semantics = [], scalar_prefetch = 0 : i64, scratch_operands = 0 : i64, tpu.core_type = #tpu.core_type<tc>} {
    %c0 = arith.constant 0 : index
    %c0_0 = arith.constant 0 : index
    %0 = vector.load %arg1[%c0, %c0_0] : memref<32x28xf32, #tpu.memory_space<vmem>>, vector<32x28xf32>
    %1 = vector.extract_strided_slice %0 {offsets = [0, 0], sizes = [16, 27], strides = [1, 1]} : vector<32x28xf32> to vector<16x27xf32>
    %2 = vector.extract_strided_slice %0 {offsets = [0, 27], sizes = [16, 1], strides = [1, 1]} : vector<32x28xf32> to vector<16x1xf32>
    %3 = vector.extract_strided_slice %0 {offsets = [16, 0], sizes = [16, 16], strides = [1, 1]} : vector<32x28xf32> to vector<16x16xf32>
    %4 = vector.extract_strided_slice %0 {offsets = [16, 16], sizes = [16, 1], strides = [1, 1]} : vector<32x28xf32> to vector<16x1xf32>
    %5 = tpu.iota {dimensions = array<i32: 1>} : vector<16x288xi32>
    %c57_i32 = arith.constant 57 : i32
    %6 = vector.broadcast %c57_i32 : i32 to vector<16x288xi32>
    %7 = arith.muli %5, %6 : vector<16x288xi32>
    %c10_i32 = arith.constant 10 : i32
    %8 = vector.broadcast %c10_i32 : i32 to vector<16x288xi32>
    %9 = arith.shrsi %7, %8 : vector<16x288xi32>
    %c18_i32 = arith.constant 18 : i32
    %10 = vector.broadcast %c18_i32 : i32 to vector<16x288xi32>
    %11 = arith.muli %9, %10 : vector<16x288xi32>
    %12 = arith.subi %5, %11 : vector<16x288xi32>
    %c16_i32 = arith.constant 16 : i32
    %13 = vector.broadcast %c16_i32 : i32 to vector<16x288xi32>
    %14 = arith.cmpi slt, %12, %13 : vector<16x288xi32>
    %15 = arith.sitofp %5 : vector<16x288xi32> to vector<16x288xf32>
    %16 = tpu.iota {dimensions = array<i32: 1>} : vector<15x45xi32>
    %17 = tpu.iota {dimensions = array<i32: 0>} : vector<15x45xi32>
    %18 = arith.cmpi eq, %16, %17 : vector<15x45xi32>
    %19 = arith.extui %18 : vector<15x45xi1> to vector<15x45xi32>
    %20 = arith.sitofp %19 : vector<15x45xi32> to vector<15x45xf32>
    %c15_i32 = arith.constant 15 : i32
    %21 = vector.broadcast %c15_i32 : i32 to vector<15x45xi32>
    %22 = arith.addi %17, %21 : vector<15x45xi32>
    %23 = arith.cmpi eq, %16, %22 : vector<15x45xi32>
    %24 = arith.extui %23 : vector<15x45xi1> to vector<15x45xi32>
    %25 = arith.sitofp %24 : vector<15x45xi32> to vector<15x45xf32>
    %c30_i32 = arith.constant 30 : i32
    %26 = vector.broadcast %c30_i32 : i32 to vector<15x45xi32>
    %27 = arith.addi %17, %26 : vector<15x45xi32>
    %28 = arith.cmpi eq, %16, %27 : vector<15x45xi32>
    %29 = arith.extui %28 : vector<15x45xi1> to vector<15x45xi32>
    %30 = arith.sitofp %29 : vector<15x45xi32> to vector<15x45xf32>
    %c0_1 = arith.constant 0 : index
    %c0_2 = arith.constant 0 : index
    %c0_3 = arith.constant 0 : index
    %31 = vector.load %arg0[%c0_1, %c0_2, %c0_3] : memref<2x27x288xf32, #tpu.memory_space<vmem>>, vector<1x27x288xf32>
    %32 = vector.shape_cast %31 : vector<1x27x288xf32> to vector<27x288xf32>
    %cst = arith.constant dense<0.000000e+00> : vector<16x288xf32>
    %33 = tpu.matmul %1, %32, %cst {dimension_numbers = #tpu.dot_dimension_numbers<[1], [0], [0], [1], [0, 0, 1, 1], [], []>} : vector<16x27xf32>, vector<27x288xf32>, vector<16x288xf32> -> vector<16x288xf32>
    %34 = vector.broadcast %2 : vector<16x1xf32> to vector<16x288xf32>
    %35 = arith.addf %33, %34 : vector<16x288xf32>
    %cst_4 = arith.constant 0.000000e+00 : f32
    %36 = vector.broadcast %cst_4 : f32 to vector<16x288xf32>
    %37 = arith.maximumf %35, %36 : vector<16x288xf32>
    %cst_5 = arith.constant dense<0.000000e+00> : vector<16x288xf32>
    %38 = tpu.matmul %3, %37, %cst_5 {dimension_numbers = #tpu.dot_dimension_numbers<[1], [0], [0], [1], [0, 0, 1, 1], [], []>} : vector<16x16xf32>, vector<16x288xf32>, vector<16x288xf32> -> vector<16x288xf32>
    %39 = vector.broadcast %4 : vector<16x1xf32> to vector<16x288xf32>
    %40 = arith.addf %38, %39 : vector<16x288xf32>
    %c0_6 = arith.constant 0 : index
    %c0_7 = arith.constant 0 : index
    %c0_8 = arith.constant 0 : index
    %41 = vector.load %arg3[%c0_6, %c0_7, %c0_8] : memref<2x16x288xf32, #tpu.memory_space<vmem>>, vector<1x16x288xf32>
    %42 = vector.shape_cast %41 : vector<1x16x288xf32> to vector<16x288xf32>
    %43 = vector.shape_cast %40 : vector<16x288xf32> to vector<1x16x288xf32>
    tpu.vector_store %arg3[%c0_6, %c0_7, %c0_8], %43 {strides = array<i32>} : memref<2x16x288xf32, #tpu.memory_space<vmem>>, vector<1x16x288xf32>,
    %cst_9 = arith.constant 0xFF800000 : f32
    %44 = vector.broadcast %cst_9 : f32 to vector<16x288xf32>
    %45 = arith.select %14, %40, %44 : vector<16x288xi1>, vector<16x288xf32>
    %cst_10 = arith.constant dense<0xFF800000> : vector<16xf32>
    %46 = vector.multi_reduction <maximumf>, %45, %cst_10 [1] : vector<16x288xf32> to vector<16xf32>
    %47 = vector.shape_cast %46 : vector<16xf32> to vector<16x1xf32>
    %48 = vector.broadcast %47 : vector<16x1xf32> to vector<16x288xf32>
    %49 = arith.cmpf oeq, %45, %48 : vector<16x288xf32>
    %cst_11 = arith.constant 5.760000e+02 : f32
    %50 = vector.broadcast %cst_11 : f32 to vector<16x288xf32>
    %51 = arith.select %49, %15, %50 : vector<16x288xi1>, vector<16x288xf32>
    %cst_12 = arith.constant dense<0x7F800000> : vector<16xf32>
    %52 = vector.multi_reduction <minimumf>, %51, %cst_12 [1] : vector<16x288xf32> to vector<16xf32>
    %53 = vector.shape_cast %52 : vector<16xf32> to vector<16x1xf32>
    %54 = arith.fptosi %53 : vector<16x1xf32> to vector<16x1xi32>
    %c57_i32_13 = arith.constant 57 : i32
    %55 = vector.broadcast %c57_i32_13 : i32 to vector<16x1xi32>
    %56 = arith.muli %54, %55 : vector<16x1xi32>
    %c10_i32_14 = arith.constant 10 : i32
    %57 = vector.broadcast %c10_i32_14 : i32 to vector<16x1xi32>
    %58 = arith.shrsi %56, %57 : vector<16x1xi32>
    %c18_i32_15 = arith.constant 18 : i32
    %59 = vector.broadcast %c18_i32_15 : i32 to vector<16x1xi32>
    %60 = arith.muli %58, %59 : vector<16x1xi32>
    %61 = arith.subi %54, %60 : vector<16x1xi32>
    %62 = vector.extract_strided_slice %47 {offsets = [0, 0], sizes = [15, 1], strides = [1, 1]} : vector<16x1xf32> to vector<15x1xf32>
    %cst_16 = arith.constant 0.000000e+00 : f32
    %63 = vector.broadcast %cst_16 : f32 to vector<15x1xf32>
    %64 = arith.cmpf ogt, %62, %63 : vector<15x1xf32>
    %65 = arith.extui %64 : vector<15x1xi1> to vector<15x1xi32>
    %66 = arith.sitofp %65 : vector<15x1xi32> to vector<15x1xf32>
    %67 = vector.extract_strided_slice %61 {offsets = [0, 0], sizes = [15, 1], strides = [1, 1]} : vector<16x1xi32> to vector<15x1xi32>
    %68 = arith.sitofp %67 : vector<15x1xi32> to vector<15x1xf32>
    %69 = arith.mulf %68, %66 : vector<15x1xf32>
    %70 = vector.extract_strided_slice %58 {offsets = [0, 0], sizes = [15, 1], strides = [1, 1]} : vector<16x1xi32> to vector<15x1xi32>
    %71 = arith.sitofp %70 : vector<15x1xi32> to vector<15x1xf32>
    %72 = arith.mulf %71, %66 : vector<15x1xf32>
    %cst_17 = arith.constant 4.000000e+01 : f32
    %73 = vector.broadcast %cst_17 : f32 to vector<15x1xf32>
    %74 = arith.mulf %69, %73 : vector<15x1xf32>
    %cst_18 = arith.constant 0.000000e+00 : f32
    %75 = vector.broadcast %cst_18 : f32 to vector<15x1xf32>
    %76 = arith.addf %74, %75 : vector<15x1xf32>
    %cst_19 = arith.constant 3.000000e+01 : f32
    %77 = vector.broadcast %cst_19 : f32 to vector<15x1xf32>
    %78 = arith.mulf %72, %77 : vector<15x1xf32>
    %cst_20 = arith.constant 0.000000e+00 : f32
    %79 = vector.broadcast %cst_20 : f32 to vector<15x1xf32>
    %80 = arith.addf %78, %79 : vector<15x1xf32>
    %81 = vector.broadcast %76 : vector<15x1xf32> to vector<15x45xf32>
    %82 = arith.mulf %81, %20 : vector<15x45xf32>
    %83 = vector.broadcast %80 : vector<15x1xf32> to vector<15x45xf32>
    %84 = arith.mulf %83, %25 : vector<15x45xf32>
    %85 = arith.addf %82, %84 : vector<15x45xf32>
    %86 = vector.broadcast %62 : vector<15x1xf32> to vector<15x45xf32>
    %87 = arith.mulf %86, %30 : vector<15x45xf32>
    %88 = arith.addf %85, %87 : vector<15x45xf32>
    %cst_21 = arith.constant dense<0.000000e+00> : vector<45xf32>
    %89 = vector.multi_reduction <add>, %88, %cst_21 [0] : vector<15x45xf32> to vector<45xf32>
    %90 = vector.shape_cast %89 : vector<45xf32> to vector<1x45xf32>
    %c1 = arith.constant 1 : index
    %c0_22 = arith.constant 0 : index
    %c0_23 = arith.constant 0 : index
    %91 = vector.load %arg0[%c1, %c0_22, %c0_23] : memref<2x27x288xf32, #tpu.memory_space<vmem>>, vector<1x27x288xf32>
    %92 = vector.shape_cast %91 : vector<1x27x288xf32> to vector<27x288xf32>
    %cst_24 = arith.constant dense<0.000000e+00> : vector<16x288xf32>
    %93 = tpu.matmul %1, %92, %cst_24 {dimension_numbers = #tpu.dot_dimension_numbers<[1], [0], [0], [1], [0, 0, 1, 1], [], []>} : vector<16x27xf32>, vector<27x288xf32>, vector<16x288xf32> -> vector<16x288xf32>
    %94 = vector.broadcast %2 : vector<16x1xf32> to vector<16x288xf32>
    %95 = arith.addf %93, %94 : vector<16x288xf32>
    %cst_25 = arith.constant 0.000000e+00 : f32
    %96 = vector.broadcast %cst_25 : f32 to vector<16x288xf32>
    %97 = arith.maximumf %95, %96 : vector<16x288xf32>
    %cst_26 = arith.constant dense<0.000000e+00> : vector<16x288xf32>
    %98 = tpu.matmul %3, %97, %cst_26 {dimension_numbers = #tpu.dot_dimension_numbers<[1], [0], [0], [1], [0, 0, 1, 1], [], []>} : vector<16x16xf32>, vector<16x288xf32>, vector<16x288xf32> -> vector<16x288xf32>
    %99 = vector.broadcast %4 : vector<16x1xf32> to vector<16x288xf32>
    %100 = arith.addf %98, %99 : vector<16x288xf32>
    %c1_27 = arith.constant 1 : index
    %c0_28 = arith.constant 0 : index
    %c0_29 = arith.constant 0 : index
    %101 = vector.load %arg3[%c1_27, %c0_28, %c0_29] : memref<2x16x288xf32, #tpu.memory_space<vmem>>, vector<1x16x288xf32>
    %102 = vector.shape_cast %101 : vector<1x16x288xf32> to vector<16x288xf32>
    %103 = vector.shape_cast %100 : vector<16x288xf32> to vector<1x16x288xf32>
    tpu.vector_store %arg3[%c1_27, %c0_28, %c0_29], %103 {strides = array<i32>} : memref<2x16x288xf32, #tpu.memory_space<vmem>>, vector<1x16x288xf32>,
    %cst_30 = arith.constant 0xFF800000 : f32
    %104 = vector.broadcast %cst_30 : f32 to vector<16x288xf32>
    %105 = arith.select %14, %100, %104 : vector<16x288xi1>, vector<16x288xf32>
    %cst_31 = arith.constant dense<0xFF800000> : vector<16xf32>
    %106 = vector.multi_reduction <maximumf>, %105, %cst_31 [1] : vector<16x288xf32> to vector<16xf32>
    %107 = vector.shape_cast %106 : vector<16xf32> to vector<16x1xf32>
    %108 = vector.broadcast %107 : vector<16x1xf32> to vector<16x288xf32>
    %109 = arith.cmpf oeq, %105, %108 : vector<16x288xf32>
    %cst_32 = arith.constant 5.760000e+02 : f32
    %110 = vector.broadcast %cst_32 : f32 to vector<16x288xf32>
    %111 = arith.select %109, %15, %110 : vector<16x288xi1>, vector<16x288xf32>
    %cst_33 = arith.constant dense<0x7F800000> : vector<16xf32>
    %112 = vector.multi_reduction <minimumf>, %111, %cst_33 [1] : vector<16x288xf32> to vector<16xf32>
    %113 = vector.shape_cast %112 : vector<16xf32> to vector<16x1xf32>
    %114 = arith.fptosi %113 : vector<16x1xf32> to vector<16x1xi32>
    %c57_i32_34 = arith.constant 57 : i32
    %115 = vector.broadcast %c57_i32_34 : i32 to vector<16x1xi32>
    %116 = arith.muli %114, %115 : vector<16x1xi32>
    %c10_i32_35 = arith.constant 10 : i32
    %117 = vector.broadcast %c10_i32_35 : i32 to vector<16x1xi32>
    %118 = arith.shrsi %116, %117 : vector<16x1xi32>
    %c18_i32_36 = arith.constant 18 : i32
    %119 = vector.broadcast %c18_i32_36 : i32 to vector<16x1xi32>
    %120 = arith.muli %118, %119 : vector<16x1xi32>
    %121 = arith.subi %114, %120 : vector<16x1xi32>
    %122 = vector.extract_strided_slice %107 {offsets = [0, 0], sizes = [15, 1], strides = [1, 1]} : vector<16x1xf32> to vector<15x1xf32>
    %cst_37 = arith.constant 0.000000e+00 : f32
    %123 = vector.broadcast %cst_37 : f32 to vector<15x1xf32>
    %124 = arith.cmpf ogt, %122, %123 : vector<15x1xf32>
    %125 = arith.extui %124 : vector<15x1xi1> to vector<15x1xi32>
    %126 = arith.sitofp %125 : vector<15x1xi32> to vector<15x1xf32>
    %127 = vector.extract_strided_slice %121 {offsets = [0, 0], sizes = [15, 1], strides = [1, 1]} : vector<16x1xi32> to vector<15x1xi32>
    %128 = arith.sitofp %127 : vector<15x1xi32> to vector<15x1xf32>
    %129 = arith.mulf %128, %126 : vector<15x1xf32>
    %130 = vector.extract_strided_slice %118 {offsets = [0, 0], sizes = [15, 1], strides = [1, 1]} : vector<16x1xi32> to vector<15x1xi32>
    %131 = arith.sitofp %130 : vector<15x1xi32> to vector<15x1xf32>
    %132 = arith.mulf %131, %126 : vector<15x1xf32>
    %cst_38 = arith.constant 4.000000e+01 : f32
    %133 = vector.broadcast %cst_38 : f32 to vector<15x1xf32>
    %134 = arith.mulf %129, %133 : vector<15x1xf32>
    %cst_39 = arith.constant 0.000000e+00 : f32
    %135 = vector.broadcast %cst_39 : f32 to vector<15x1xf32>
    %136 = arith.addf %134, %135 : vector<15x1xf32>
    %cst_40 = arith.constant 3.000000e+01 : f32
    %137 = vector.broadcast %cst_40 : f32 to vector<15x1xf32>
    %138 = arith.mulf %132, %137 : vector<15x1xf32>
    %cst_41 = arith.constant 0.000000e+00 : f32
    %139 = vector.broadcast %cst_41 : f32 to vector<15x1xf32>
    %140 = arith.addf %138, %139 : vector<15x1xf32>
    %141 = vector.broadcast %136 : vector<15x1xf32> to vector<15x45xf32>
    %142 = arith.mulf %141, %20 : vector<15x45xf32>
    %143 = vector.broadcast %140 : vector<15x1xf32> to vector<15x45xf32>
    %144 = arith.mulf %143, %25 : vector<15x45xf32>
    %145 = arith.addf %142, %144 : vector<15x45xf32>
    %146 = vector.broadcast %122 : vector<15x1xf32> to vector<15x45xf32>
    %147 = arith.mulf %146, %30 : vector<15x45xf32>
    %148 = arith.addf %145, %147 : vector<15x45xf32>
    %cst_42 = arith.constant dense<0.000000e+00> : vector<45xf32>
    %149 = vector.multi_reduction <add>, %148, %cst_42 [0] : vector<15x45xf32> to vector<45xf32>
    %150 = vector.shape_cast %149 : vector<45xf32> to vector<1x45xf32>
    %151 = tpu.concatenate %90, %150 in 0 : vector<1x45xf32>, vector<1x45xf32> -> vector<2x45xf32>
    %152 = vector.extract_strided_slice %151 {offsets = [0, 0], sizes = [2, 30], strides = [1, 1]} : vector<2x45xf32> to vector<2x30xf32>
    %c0_43 = arith.constant 0 : index
    %c0_44 = arith.constant 0 : index
    %153 = vector.load %arg2[%c0_43, %c0_44] : memref<232x64xf32, #tpu.memory_space<vmem>>, vector<30x64xf32>
    %c32 = arith.constant 32 : index
    %c0_45 = arith.constant 0 : index
    %154 = vector.load %arg2[%c32, %c0_45] : memref<232x64xf32, #tpu.memory_space<vmem>>, vector<64x64xf32>
    %c96 = arith.constant 96 : index
    %c0_46 = arith.constant 0 : index
    %155 = vector.load %arg2[%c96, %c0_46] : memref<232x64xf32, #tpu.memory_space<vmem>>, vector<64x64xf32>
    %c160 = arith.constant 160 : index
    %c0_47 = arith.constant 0 : index
    %156 = vector.load %arg2[%c160, %c0_47] : memref<232x64xf32, #tpu.memory_space<vmem>>, vector<64x64xf32>
    %c224 = arith.constant 224 : index
    %c0_48 = arith.constant 0 : index
    %157 = vector.load %arg2[%c224, %c0_48] : memref<232x64xf32, #tpu.memory_space<vmem>>, vector<8x64xf32>
    %158 = vector.extract_strided_slice %157 {offsets = [0, 0], sizes = [1, 64], strides = [1, 1]} : vector<8x64xf32> to vector<1x64xf32>
    %159 = vector.extract_strided_slice %157 {offsets = [1, 0], sizes = [1, 64], strides = [1, 1]} : vector<8x64xf32> to vector<1x64xf32>
    %160 = vector.extract_strided_slice %157 {offsets = [2, 0], sizes = [1, 64], strides = [1, 1]} : vector<8x64xf32> to vector<1x64xf32>
    %161 = vector.extract_strided_slice %157 {offsets = [3, 0], sizes = [1, 64], strides = [1, 1]} : vector<8x64xf32> to vector<1x64xf32>
    %162 = vector.extract_strided_slice %157 {offsets = [4, 0], sizes = [1, 45], strides = [1, 1]} : vector<8x64xf32> to vector<1x45xf32>
    %163 = vector.extract_strided_slice %157 {offsets = [5, 0], sizes = [1, 45], strides = [1, 1]} : vector<8x64xf32> to vector<1x45xf32>
    %164 = vector.extract_strided_slice %157 {offsets = [6, 0], sizes = [1, 30], strides = [1, 1]} : vector<8x64xf32> to vector<1x30xf32>
    %165 = vector.extract_strided_slice %157 {offsets = [7, 0], sizes = [1, 30], strides = [1, 1]} : vector<8x64xf32> to vector<1x30xf32>
    %166 = vector.broadcast %164 : vector<1x30xf32> to vector<2x30xf32>
    %167 = arith.subf %152, %166 : vector<2x30xf32>
    %cst_49 = arith.constant 9.99999993E-9 : f32
    %168 = vector.broadcast %cst_49 : f32 to vector<1x30xf32>
    %169 = arith.addf %165, %168 : vector<1x30xf32>
    %170 = vector.broadcast %169 : vector<1x30xf32> to vector<2x30xf32>
    %171 = arith.divf %167, %170 : vector<2x30xf32>
    %cst_50 = arith.constant dense<0.000000e+00> : vector<2x64xf32>
    %172 = tpu.matmul %171, %153, %cst_50 {dimension_numbers = #tpu.dot_dimension_numbers<[1], [0], [0], [1], [0, 0, 1, 1], [], []>} : vector<2x30xf32>, vector<30x64xf32>, vector<2x64xf32> -> vector<2x64xf32>
    %173 = vector.broadcast %158 : vector<1x64xf32> to vector<2x64xf32>
    %174 = arith.addf %172, %173 : vector<2x64xf32>
    %cst_51 = arith.constant 0.000000e+00 : f32
    %175 = vector.broadcast %cst_51 : f32 to vector<2x64xf32>
    %176 = arith.maximumf %174, %175 : vector<2x64xf32>
    %cst_52 = arith.constant dense<0.000000e+00> : vector<2x64xf32>
    %177 = tpu.matmul %176, %154, %cst_52 {dimension_numbers = #tpu.dot_dimension_numbers<[1], [0], [0], [1], [0, 0, 1, 1], [], []>} : vector<2x64xf32>, vector<64x64xf32>, vector<2x64xf32> -> vector<2x64xf32>
    %178 = vector.broadcast %159 : vector<1x64xf32> to vector<2x64xf32>
    %179 = arith.addf %177, %178 : vector<2x64xf32>
    %cst_53 = arith.constant 0.000000e+00 : f32
    %180 = vector.broadcast %cst_53 : f32 to vector<2x64xf32>
    %181 = arith.maximumf %179, %180 : vector<2x64xf32>
    %cst_54 = arith.constant dense<0.000000e+00> : vector<2x64xf32>
    %182 = tpu.matmul %181, %155, %cst_54 {dimension_numbers = #tpu.dot_dimension_numbers<[1], [0], [0], [1], [0, 0, 1, 1], [], []>} : vector<2x64xf32>, vector<64x64xf32>, vector<2x64xf32> -> vector<2x64xf32>
    %183 = vector.broadcast %160 : vector<1x64xf32> to vector<2x64xf32>
    %184 = arith.addf %182, %183 : vector<2x64xf32>
    %cst_55 = arith.constant 0.000000e+00 : f32
    %185 = vector.broadcast %cst_55 : f32 to vector<2x64xf32>
    %186 = arith.maximumf %184, %185 : vector<2x64xf32>
    %187 = arith.addf %176, %186 : vector<2x64xf32>
    %cst_56 = arith.constant dense<0.000000e+00> : vector<2x64xf32>
    %188 = tpu.matmul %187, %156, %cst_56 {dimension_numbers = #tpu.dot_dimension_numbers<[1], [0], [0], [1], [0, 0, 1, 1], [], []>} : vector<2x64xf32>, vector<64x64xf32>, vector<2x64xf32> -> vector<2x64xf32>
    %189 = vector.broadcast %161 : vector<1x64xf32> to vector<2x64xf32>
    %190 = arith.addf %188, %189 : vector<2x64xf32>
    %191 = vector.extract_strided_slice %190 {offsets = [0, 0], sizes = [2, 45], strides = [1, 1]} : vector<2x64xf32> to vector<2x45xf32>
    %192 = vector.broadcast %163 : vector<1x45xf32> to vector<2x45xf32>
    %193 = arith.mulf %191, %192 : vector<2x45xf32>
    %194 = vector.broadcast %162 : vector<1x45xf32> to vector<2x45xf32>
    %195 = arith.addf %193, %194 : vector<2x45xf32>
    %cst_57 = arith.constant 0.000000e+00 : f32
    %196 = vector.broadcast %cst_57 : f32 to vector<2x38xf32>
    %197 = tpu.concatenate %151, %195, %196 in 1 : vector<2x45xf32>, vector<2x45xf32>, vector<2x38xf32> -> vector<2x128xf32>
    %c0_58 = arith.constant 0 : index
    %c0_59 = arith.constant 0 : index
    %198 = vector.load %arg4[%c0_58, %c0_59] : memref<2x128xf32, #tpu.memory_space<vmem>>, vector<2x128xf32>
    tpu.vector_store %arg4[%c0_58, %c0_59], %197 {strides = array<i32>} : memref<2x128xf32, #tpu.memory_space<vmem>>, vector<2x128xf32>,
    return
  }
}

</mosaic_0001>

<llo_original>
// kernel: hpe_net_forward.1
$region0: #{hpe_net_forward.1}
  #allocation0 [shape = 'u32[]', space=smem, size = 0x4, offset = 0x4, fixed_abs, tag = 'smem constant byte address 0x4 - core index']
  #allocation1 [shape = 'u32[144,128]{1,0:T(1,128)}', space=vmem, size = 0x12000, scoped, tag = 'internal scratch']
  %s0 = inlined_call_operand.vmem [shape: f32[2,27,288], index: 0, kind: input, shape index: {}]
  %s1 = inlined_call_operand.vmem [shape: f32[32,28], index: 1, kind: input, shape index: {}]
  %s2 = inlined_call_operand.vmem [shape: f32[232,64], index: 2, kind: input, shape index: {}]
  %s3 = inlined_call_operand.vmem [shape: f32[2,16,288], index: 3, kind: output, shape index: {0}]
  %s4 = inlined_call_operand.vmem [shape: f32[2,128], index: 4, kind: output, shape index: {1}]
  %5 = xla_tuple %s3, %s4
  %s6 = sld [smem:[#allocation0]]
  $region30: #{hpe_net_forward.1} parent=0
    _
  %s8 = ssub.s32 1, %s6
  %s9 = scalar_select 0, %s8, %s6
  // Predicated region
  $region2: #{hpe_net_forward.1} parent=0 // pred_check
    _
  $region3: #{hpe_net_forward.1} parent=0 // pred_check_branch
    %11 = sbr.rel (0) target = $region5
  $region4: #{hpe_net_forward.1} parent=0 // pred_region
    _
  $region5: #{hpe_net_forward.1} parent=0 // pred_fallthru
    _
  // Predicated region
  $region6: #{hpe_net_forward.1} parent=0 // pred_check
    _
  $region7: #{hpe_net_forward.1} parent=0 // pred_check_branch
    %13 = sbr.rel (0) target = $region9
  $region8: #{hpe_net_forward.1} parent=0 // pred_region
    _
  $region9: #{hpe_net_forward.1} parent=0 // pred_fallthru
    _
  // Predicated region
  $region10: #{hpe_net_forward.1} parent=0 // pred_check
    _
  $region11: #{hpe_net_forward.1} parent=0 // pred_check_branch
    %15 = sbr.rel (0) target = $region13
  $region12: #{hpe_net_forward.1} parent=0 // pred_region
    _
  $region13: #{hpe_net_forward.1} parent=0 // pred_fallthru
    _
  %v16 = vld [vmem:[%s1] sm:$0xff]
  %v17 = vld [vmem:[%s1 + $0x8] sm:$0xff]
  %v18 = vld [vmem:[%s1 + $0x10] sm:$0xff]
  %v19 = vld [vmem:[%s1 + $0x18] sm:$0xff]
  %v20 = vlaneseq
  %v21 = vand.u32 %v20, 127
  %v22 = vadd.s32 %v21, 128
  %v23 = vadd.s32 %v21, 256
  %v24 = vmul.u32 %v21, 57
  %v25 = vmul.u32 %v22, 57
  %v26 = vmul.u32 %v23, 57
  %v27 = vshra.s32 %v24, 10
  %v28 = vshra.s32 %v25, 10
  %v29 = vshra.s32 %v26, 10
  %v30 = vmul.u32 %v27, 18
  %v31 = vmul.u32 %v28, 18
  %v32 = vmul.u32 %v29, 18
  %v33 = vsub.s32 %v21, %v30
  %v34 = vsub.s32 %v22, %v31
  %v35 = vsub.s32 %v23, %v32
  %vm36 = vcmp.lt.s32.totalorder %v33, 16
  %vm37 = vcmp.lt.s32.totalorder %v34, 16
  %vm38 = vcmp.lt.s32.totalorder %v35, 16
  %v39 = vcvt.s32.f32 %v21
  %v40 = vcvt.s32.f32 %v22
  %v41 = vcvt.s32.f32 %v23
  %v42 = vlaneseq
  %v43 = vshrl.u32 %v42, 7
  %v44 = vadd.s32 %v43, 8
  %vm45 = vcmp.eq.s32.totalorder %v21, %v43
  %vm46 = vcmp.eq.s32.totalorder %v21, %v44
  %v47 = vsel %vm45, 1, 0
  %v48 = vsel %vm46, 1, 0
  %v49 = vcvt.s32.f32 %v47
  %v50 = vcvt.s32.f32 %v48
  %v51 = vadd.s32 %v43, 15
  %v52 = vadd.s32 %v44, 15
  %vm53 = vcmp.eq.s32.totalorder %v21, %v51
  %vm54 = vcmp.eq.s32.totalorder %v21, %v52
  %v55 = vsel %vm53, 1, 0
  %v56 = vsel %vm54, 1, 0
  %v57 = vcvt.s32.f32 %v55
  %v58 = vcvt.s32.f32 %v56
  %v59 = vadd.s32 %v43, 30
  %v60 = vadd.s32 %v44, 30
  %vm61 = vcmp.eq.s32.totalorder %v21, %v59
  %vm62 = vcmp.eq.s32.totalorder %v21, %v60
  %v63 = vsel %vm61, 1, 0
  %v64 = vsel %vm62, 1, 0
  %v65 = vcvt.s32.f32 %v63
  %v66 = vcvt.s32.f32 %v64
  %v67 = vld [vmem:[%s0] sm:$0xff]
  %v68 = vld [vmem:[%s0 + $0x8] sm:$0xff]
  %v69 = vld [vmem:[%s0 + $0x10] sm:$0xff]
  %v70 = vld [vmem:[%s0 + $0x18] sm:$0xff]
  %v71 = vld [vmem:[%s0 + $0x20] sm:$0xff]
  %v72 = vld [vmem:[%s0 + $0x28] sm:$0xff]
  %v73 = vld [vmem:[%s0 + $0x30] sm:$0xff]
  %v74 = vld [vmem:[%s0 + $0x38] sm:$0xff]
  %v75 = vld [vmem:[%s0 + $0x40] sm:$0xff]
  %v76 = vld [vmem:[%s0 + $0x48] sm:$0x7]
  %v77 = vld [vmem:[%s0 + $0x50] sm:$0x7]
  %v78 = vld [vmem:[%s0 + $0x58] sm:$0x7]
  %80 = vset.pattern.permute.xlu0 27
  %81 = vperm.xlu0 %80, %v16
  %v82 = vpop.permute.xlu0 %81
  %85 = vset.pattern.permute.xlu0 27
  %86 = vperm.xlu0 %85, %v17
  %v87 = vpop.permute.xlu0 %86
  %vm89 = vcmask 220160
  %v90 = vsel %vm89, %v16, 0
  %v92 = vsel %vm89, %v17, 0
  %vm94 = vcmask 1042432
  %v96 = vsel %vm94, %v76, 0
  %v99 = vsel %vm94, %v77, 0
  %v102 = vsel %vm94, %v78, 0
  %104 = vmatprep.subr.mxu0 %v68
  %105 = vmatpush1.msra.mxu0 %v67
  %106 = vmatprep.subr.mxu0 %v71
  %107 = vmatpush1.msra.mxu0 %v70
  %108 = vmatprep.subr.mxu0 %v74
  %109 = vmatpush1.msra.mxu0 %v73
  %110 = vmatprep.subr.mxu0 %v99
  %111 = vmatpush1.msra.mxu0 %v96
  %112 = vmatprep.subr.mxu0 0.0
  %113 = vmatpush1.msra.mxu0 0.0
  %114 = vmatprep.subr.mxu0 0.0
  %115 = vmatpush1.msra.mxu0 0.0
  %116 = vmatprep.subr.mxu0 0.0
  %117 = vmatpush1.msra.mxu0 0.0
  %118 = vmatprep.subr.mxu0 0.0
  %119 = vmatpush1.msra.mxu0 0.0
  %120 = vmatprep.subr.mxu0 0.0
  %121 = vmatpush1.msra.mxu0 0.0
  %122 = vmatprep.subr.mxu0 0.0
  %123 = vmatpush1.msra.mxu0 0.0
  %124 = vmatprep.subr.mxu0 0.0
  %125 = vmatpush1.msra.mxu0 0.0
  %126 = vmatprep.subr.mxu0 0.0
  %127 = vmatpush1.msra.mxu0 0.0
  %128 = vmatprep.subr.mxu0 0.0
  %129 = vmatpush1.msra.mxu0 0.0
  %130 = vmatprep.subr.mxu0 0.0
  %131 = vmatpush1.msra.mxu0 0.0
  %132 = vmatprep.subr.mxu0 0.0
  %133 = vmatpush1.msra.mxu0 0.0
  %134 = vmatprep.subr.mxu0 0.0
  %135 = vmatpush1.msra.mxu0 0.0
  %136 = vmatprep.subr.mxu0 0.0
  %137 = vmatpush1.msra.mxu0 0.0
  %138 = vmatprep.subr.mxu0 0.0
  %139 = vmatpush1.msra.mxu0 0.0
  %140 = vmatprep.subr.mxu0 0.0
  %141 = vmatpush1.msra.mxu0 0.0
  %142 = vmatprep.subr.mxu0 0.0
  %143 = vmatpush1.msra.mxu0 0.0
  %144 = vmatprep.subr.mxu0 0.0
  %145 = vmatpush1.msra.mxu0 0.0
  %146 = vmatprep.subr.mxu0 0.0
  %147 = vmatpush1.msra.mxu0 0.0
  %148 = vmatprep.subr.mxu0 0.0
  %149 = vmatpush1.msra.mxu0 0.0
  %150 = vmatprep.subr.mxu0 0.0
  %151 = vmatpush1.msra.mxu0 0.0
  %152 = vmatprep.subr.mxu0 0.0
  %153 = vmatpush1.msra.mxu0 0.0
  %154 = vmatprep.subr.mxu0 0.0
  %155 = vmatpush1.msra.mxu0 0.0
  %156 = vmatprep.subr.mxu0 0.0
  %157 = vmatpush1.msra.mxu0 0.0
  %158 = vmatprep.subr.mxu0 0.0
  %159 = vmatpush1.msra.mxu0 0.0
  %160 = vmatprep.subr.mxu0 0.0
  %161 = vmatpush1.msra.mxu0 0.0
  %162 = vmatprep.subr.mxu0 0.0
  %163 = vmatpush1.msra.mxu0 0.0
  %164 = vmatprep.subr.mxu0 0.0
  %165 = vmatpush1.msra.mxu0 0.0
  %166 = vmatprep.subr.mxu0 0.0
  %167 = vmatpush1.msra.mxu0 0.0
  %168 = vmatprep.mubr.f32.mxu0 0.0
  %169 = vmatmul.mubr.f32.gmra.mrb[0].mxu0 %v90
  %v170 = vpop.f32.mrb[0].mxu0
  %v171 = vadd.f32 %v82, %v170
  %v172 = vpop.f32.mrb[0].mxu0
  %v173 = vadd.f32 %v82, %v172
  %174 = vmatprep.mubr.f32.mxu0 0.0
  %175 = vmatmul.mubr.f32.gmra.mrb[0].mxu0 %v92
  %v176 = vpop.f32.mrb[0].mxu0
  %v177 = vadd.f32 %v87, %v176
  %v178 = vpop.f32.mrb[0].mxu0
  %v179 = vadd.f32 %v87, %v178
  %180 = vdwg.mxu0
  %181 = vmatprep.subr.mxu0 0.0
  %182 = vmatpush1.msra.mxu0 %v69
  %183 = vmatprep.subr.mxu0 0.0
  %184 = vmatpush1.msra.mxu0 %v72
  %185 = vmatprep.subr.mxu0 0.0
  %186 = vmatpush1.msra.mxu0 %v75
  %187 = vmatprep.subr.mxu0 0.0
  %188 = vmatpush1.msra.mxu0 %v102
  %189 = vmatprep.subr.mxu0 0.0
  %190 = vmatpush1.msra.mxu0 0.0
  %191 = vmatprep.subr.mxu0 0.0
  %192 = vmatpush1.msra.mxu0 0.0
  %193 = vmatprep.subr.mxu0 0.0
  %194 = vmatpush1.msra.mxu0 0.0
  %195 = vmatprep.subr.mxu0 0.0
  %196 = vmatpush1.msra.mxu0 0.0
  %197 = vmatprep.subr.mxu0 0.0
  %198 = vmatpush1.msra.mxu0 0.0
  %199 = vmatprep.subr.mxu0 0.0
  %200 = vmatpush1.msra.mxu0 0.0
  %201 = vmatprep.subr.mxu0 0.0
  %202 = vmatpush1.msra.mxu0 0.0
  %203 = vmatprep.subr.mxu0 0.0
  %204 = vmatpush1.msra.mxu0 0.0
  %205 = vmatprep.subr.mxu0 0.0
  %206 = vmatpush1.msra.mxu0 0.0
  %207 = vmatprep.subr.mxu0 0.0
  %208 = vmatpush1.msra.mxu0 0.0
  %209 = vmatprep.subr.mxu0 0.0
  %210 = vmatpush1.msra.mxu0 0.0
  %211 = vmatprep.subr.mxu0 0.0
  %212 = vmatpush1.msra.mxu0 0.0
  %213 = vmatprep.subr.mxu0 0.0
  %214 = vmatpush1.msra.mxu0 0.0
  %215 = vmatprep.subr.mxu0 0.0
  %216 = vmatpush1.msra.mxu0 0.0
  %217 = vmatprep.subr.mxu0 0.0
  %218 = vmatpush1.msra.mxu0 0.0
  %219 = vmatprep.subr.mxu0 0.0
  %220 = vmatpush1.msra.mxu0 0.0
  %221 = vmatprep.subr.mxu0 0.0
  %222 = vmatpush1.msra.mxu0 0.0
  %223 = vmatprep.subr.mxu0 0.0
  %224 = vmatpush1.msra.mxu0 0.0
  %225 = vmatprep.subr.mxu0 0.0
  %226 = vmatpush1.msra.mxu0 0.0
  %227 = vmatprep.subr.mxu0 0.0
  %228 = vmatpush1.msra.mxu0 0.0
  %229 = vmatprep.subr.mxu0 0.0
  %230 = vmatpush1.msra.mxu0 0.0
  %231 = vmatprep.subr.mxu0 0.0
  %232 = vmatpush1.msra.mxu0 0.0
  %233 = vmatprep.subr.mxu0 0.0
  %234 = vmatpush1.msra.mxu0 0.0
  %235 = vmatprep.subr.mxu0 0.0
  %236 = vmatpush1.msra.mxu0 0.0
  %237 = vmatprep.subr.mxu0 0.0
  %238 = vmatpush1.msra.mxu0 0.0
  %239 = vmatprep.subr.mxu0 0.0
  %240 = vmatpush1.msra.mxu0 0.0
  %241 = vmatprep.subr.mxu0 0.0
  %242 = vmatpush1.msra.mxu0 0.0
  %243 = vmatprep.subr.mxu0 0.0
  %244 = vmatpush1.msra.mxu0 0.0
  %245 = vmatprep.mubr.f32.mxu0 0.0
  %246 = vmatmul.mubr.f32.gmra.mrb[0].mxu0 %v90
  %v247 = vpop.f32.mrb[0].mxu0
  %v248 = vadd.f32 %v82, %v247
  %v249 = vpop.f32.mrb[0].mxu0
  %250 = vmatprep.mubr.f32.mxu0 0.0
  %251 = vmatmul.mubr.f32.gmra.mrb[0].mxu0 %v92
  %v252 = vpop.f32.mrb[0].mxu0
  %v253 = vadd.f32 %v87, %v252
  %v254 = vpop.f32.mrb[0].mxu0
  %255 = vdwg.mxu0
  %v256 = vmax.f32 %v171, 0.0
  %v257 = vmax.f32 %v173, 0.0
  %v258 = vmax.f32 %v248, 0.0
  %v259 = vmax.f32 %v177, 0.0
  %v260 = vmax.f32 %v179, 0.0
  %v261 = vmax.f32 %v253, 0.0
  %263 = vset.pattern.permute.xlu0 16
  %264 = vperm.xlu0 %263, %v18
  %v265 = vpop.permute.xlu0 %264
  %268 = vset.pattern.permute.xlu0 16
  %269 = vperm.xlu0 %268, %v19
  %v270 = vpop.permute.xlu0 %269
  %vm272 = vcmask 130048
  %v273 = vsel %vm272, %v18, 0
  %v275 = vsel %vm272, %v19, 0
  %277 = vmatprep.subr.mxu0 %v257
  %278 = vmatpush1.msra.mxu0 %v256
  %279 = vmatprep.subr.mxu0 %v260
  %280 = vmatpush1.msra.mxu0 %v259
  %281 = vmatprep.subr.mxu0 0.0
  %282 = vmatpush1.msra.mxu0 0.0
  %283 = vmatprep.subr.mxu0 0.0
  %284 = vmatpush1.msra.mxu0 0.0
  %285 = vmatprep.subr.mxu0 0.0
  %286 = vmatpush1.msra.mxu0 0.0
  %287 = vmatprep.subr.mxu0 0.0
  %288 = vmatpush1.msra.mxu0 0.0
  %289 = vmatprep.subr.mxu0 0.0
  %290 = vmatpush1.msra.mxu0 0.0
  %291 = vmatprep.subr.mxu0 0.0
  %292 = vmatpush1.msra.mxu0 0.0
  %293 = vmatprep.subr.mxu0 0.0
  %294 = vmatpush1.msra.mxu0 0.0
  %295 = vmatprep.subr.mxu0 0.0
  %296 = vmatpush1.msra.mxu0 0.0
  %297 = vmatprep.subr.mxu0 0.0
  %298 = vmatpush1.msra.mxu0 0.0
  %299 = vmatprep.subr.mxu0 0.0
  %300 = vmatpush1.msra.mxu0 0.0
  %301 = vmatprep.subr.mxu0 0.0
  %302 = vmatpush1.msra.mxu0 0.0
  %303 = vmatprep.subr.mxu0 0.0
  %304 = vmatpush1.msra.mxu0 0.0
  %305 = vmatprep.subr.mxu0 0.0
  %306 = vmatpush1.msra.mxu0 0.0
  %307 = vmatprep.subr.mxu0 0.0
  %308 = vmatpush1.msra.mxu0 0.0
  %309 = vmatprep.subr.mxu0 0.0
  %310 = vmatpush1.msra.mxu0 0.0
  %311 = vmatprep.subr.mxu0 0.0
  %312 = vmatpush1.msra.mxu0 0.0
  %313 = vmatprep.subr.mxu0 0.0
  %314 = vmatpush1.msra.mxu0 0.0
  %315 = vmatprep.subr.mxu0 0.0
  %316 = vmatpush1.msra.mxu0 0.0
  %317 = vmatprep.subr.mxu0 0.0
  %318 = vmatpush1.msra.mxu0 0.0
  %319 = vmatprep.subr.mxu0 0.0
  %320 = vmatpush1.msra.mxu0 0.0
  %321 = vmatprep.subr.mxu0 0.0
  %322 = vmatpush1.msra.mxu0 0.0
  %323 = vmatprep.subr.mxu0 0.0
  %324 = vmatpush1.msra.mxu0 0.0
  %325 = vmatprep.subr.mxu0 0.0
  %326 = vmatpush1.msra.mxu0 0.0
  %327 = vmatprep.subr.mxu0 0.0
  %328 = vmatpush1.msra.mxu0 0.0
  %329 = vmatprep.subr.mxu0 0.0
  %330 = vmatpush1.msra.mxu0 0.0
  %331 = vmatprep.subr.mxu0 0.0
  %332 = vmatpush1.msra.mxu0 0.0
  %333 = vmatprep.subr.mxu0 0.0
  %334 = vmatpush1.msra.mxu0 0.0
  %335 = vmatprep.subr.mxu0 0.0
  %336 = vmatpush1.msra.mxu0 0.0
  %337 = vmatprep.subr.mxu0 0.0
  %338 = vmatpush1.msra.mxu0 0.0
  %339 = vmatprep.subr.mxu0 0.0
  %340 = vmatpush1.msra.mxu0 0.0
  %341 = vmatprep.mubr.f32.mxu0 0.0
  %342 = vmatmul.mubr.f32.gmra.mrb[0].mxu0 %v273
  %v343 = vpop.f32.mrb[0].mxu0
  %v344 = vadd.f32 %v265, %v343
  %v345 = vpop.f32.mrb[0].mxu0
  %v346 = vadd.f32 %v265, %v345
  %347 = vmatprep.mubr.f32.mxu0 0.0
  %348 = vmatmul.mubr.f32.gmra.mrb[0].mxu0 %v275
  %v349 = vpop.f32.mrb[0].mxu0
  %v350 = vadd.f32 %v270, %v349
  %v351 = vpop.f32.mrb[0].mxu0
  %v352 = vadd.f32 %v270, %v351
  %353 = vdwg.mxu0
  %354 = vmatprep.subr.mxu0 0.0
  %355 = vmatpush1.msra.mxu0 %v258
  %356 = vmatprep.subr.mxu0 0.0
  %357 = vmatpush1.msra.mxu0 %v261
  %358 = vmatprep.subr.mxu0 0.0
  %359 = vmatpush1.msra.mxu0 0.0
  %360 = vmatprep.subr.mxu0 0.0
  %361 = vmatpush1.msra.mxu0 0.0
  %362 = vmatprep.subr.mxu0 0.0
  %363 = vmatpush1.msra.mxu0 0.0
  %364 = vmatprep.subr.mxu0 0.0
  %365 = vmatpush1.msra.mxu0 0.0
  %366 = vmatprep.subr.mxu0 0.0
  %367 = vmatpush1.msra.mxu0 0.0
  %368 = vmatprep.subr.mxu0 0.0
  %369 = vmatpush1.msra.mxu0 0.0
  %370 = vmatprep.subr.mxu0 0.0
  %371 = vmatpush1.msra.mxu0 0.0
  %372 = vmatprep.subr.mxu0 0.0
  %373 = vmatpush1.msra.mxu0 0.0
  %374 = vmatprep.subr.mxu0 0.0
  %375 = vmatpush1.msra.mxu0 0.0
  %376 = vmatprep.subr.mxu0 0.0
  %377 = vmatpush1.msra.mxu0 0.0
  %378 = vmatprep.subr.mxu0 0.0
  %379 = vmatpush1.msra.mxu0 0.0
  %380 = vmatprep.subr.mxu0 0.0
  %381 = vmatpush1.msra.mxu0 0.0
  %382 = vmatprep.subr.mxu0 0.0
  %383 = vmatpush1.msra.mxu0 0.0
  %384 = vmatprep.subr.mxu0 0.0
  %385 = vmatpush1.msra.mxu0 0.0
  %386 = vmatprep.subr.mxu0 0.0
  %387 = vmatpush1.msra.mxu0 0.0
  %388 = vmatprep.subr.mxu0 0.0
  %389 = vmatpush1.msra.mxu0 0.0
  %390 = vmatprep.subr.mxu0 0.0
  %391 = vmatpush1.msra.mxu0 0.0
  %392 = vmatprep.subr.mxu0 0.0
  %393 = vmatpush1.msra.mxu0 0.0
  %394 = vmatprep.subr.mxu0 0.0
  %395 = vmatpush1.msra.mxu0 0.0
  %396 = vmatprep.subr.mxu0 0.0
  %397 = vmatpush1.msra.mxu0 0.0
  %398 = vmatprep.subr.mxu0 0.0
  %399 = vmatpush1.msra.mxu0 0.0
  %400 = vmatprep.subr.mxu0 0.0
  %401 = vmatpush1.msra.mxu0 0.0
  %402 = vmatprep.subr.mxu0 0.0
  %403 = vmatpush1.msra.mxu0 0.0
  %404 = vmatprep.subr.mxu0 0.0
  %405 = vmatpush1.msra.mxu0 0.0
  %406 = vmatprep.subr.mxu0 0.0
  %407 = vmatpush1.msra.mxu0 0.0
  %408 = vmatprep.subr.mxu0 0.0
  %409 = vmatpush1.msra.mxu0 0.0
  %410 = vmatprep.subr.mxu0 0.0
  %411 = vmatpush1.msra.mxu0 0.0
  %412 = vmatprep.subr.mxu0 0.0
  %413 = vmatpush1.msra.mxu0 0.0
  %414 = vmatprep.subr.mxu0 0.0
  %415 = vmatpush1.msra.mxu0 0.0
  %416 = vmatprep.subr.mxu0 0.0
  %417 = vmatpush1.msra.mxu0 0.0
  %418 = vmatprep.mubr.f32.mxu0 0.0
  %419 = vmatmul.mubr.f32.gmra.mrb[0].mxu0 %v273
  %v420 = vpop.f32.mrb[0].mxu0
  %v421 = vadd.f32 %v265, %v420
  %v422 = vpop.f32.mrb[0].mxu0
  %423 = vmatprep.mubr.f32.mxu0 0.0
  %424 = vmatmul.mubr.f32.gmra.mrb[0].mxu0 %v275
  %v425 = vpop.f32.mrb[0].mxu0
  %v426 = vadd.f32 %v270, %v425
  %v427 = vpop.f32.mrb[0].mxu0
  %428 = vdwg.mxu0
  %429 = vst [vmem:[%s3] sm:$0xff] %v344
  %430 = vst [vmem:[%s3 + $0x8] sm:$0xff] %v346
  %vm431 = vcmask 261120
  %432 = vst.msk [vmem:[%s3 + $0x10] sm:$0xff] %vm431, %v421
  %433 = vst [vmem:[%s3 + $0x18] sm:$0xff] %v350
  %434 = vst [vmem:[%s3 + $0x20] sm:$0xff] %v352
  %435 = vst.msk [vmem:[%s3 + $0x28] sm:$0xff] %vm431, %v426
  %v436 = vsel %vm36, %v344, -inf
  %v437 = vsel %vm37, %v346, -inf
  %v438 = vsel %vm38, %v421, -inf
  %v439 = vsel %vm36, %v350, -inf
  %v440 = vsel %vm37, %v352, -inf
  %v441 = vsel %vm38, %v426, -inf
  %v442 = vsel %vm431, %v438, -inf
  %v443 = vmax.f32 %v436, %v442
  %v444 = vmax.f32 %v443, %v437
  %445 = vmax.xlane.f32.xlu0 %v444
  %v446 = vpop.xlane.xlu0 %445
  %v447 = vsel %vm431, %v441, -inf
  %v448 = vmax.f32 %v439, %v447
  %v449 = vmax.f32 %v448, %v440
  %450 = vmax.xlane.f32.xlu0 %v449
  %v451 = vpop.xlane.xlu0 %450
  %vm452 = vcmp.eq.f32.partialorder %v436, %v446
  %vm453 = vcmp.eq.f32.partialorder %v437, %v446
  %vm454 = vcmp.eq.f32.partialorder %v438, %v446
  %vm455 = vcmp.eq.f32.partialorder %v439, %v451
  %vm456 = vcmp.eq.f32.partialorder %v440, %v451
  %vm457 = vcmp.eq.f32.partialorder %v441, %v451
  %v458 = vsel %vm452, %v39, 576.0
  %v459 = vsel %vm453, %v40, 576.0
  %v460 = vsel %vm454, %v41, 576.0
  %v461 = vsel %vm455, %v39, 576.0
  %v462 = vsel %vm456, %v40, 576.0
  %v463 = vsel %vm457, %v41, 576.0
  %v464 = vsel %vm431, %v460, inf
  %v465 = vmin.f32 %v458, %v464
  %v466 = vmin.f32 %v465, %v459
  %467 = vmin.xlane.f32.xlu0 %v466
  %v468 = vpop.xlane.xlu0 %467
  %v469 = vsel %vm431, %v463, inf
  %v470 = vmin.f32 %v461, %v469
  %v471 = vmin.f32 %v470, %v462
  %472 = vmin.xlane.f32.xlu0 %v471
  %v473 = vpop.xlane.xlu0 %472
  %v474 = vcvt.f32.s32.to.zero.pseudo %v468
  %v475 = vcvt.f32.s32.to.zero.pseudo %v473
  %v476 = vmul.u32 %v474, 57
  %v477 = vmul.u32 %v475, 57
  %v478 = vshra.s32 %v476, 10
  %v479 = vshra.s32 %v477, 10
  %v480 = vmul.u32 %v478, 18
  %v481 = vmul.u32 %v479, 18
  %v482 = vsub.s32 %v474, %v480
  %v483 = vsub.s32 %v475, %v481
  %vm484 = vcmp.gt.f32.partialorder %v446, 0.0
  %vm485 = vcmp.gt.f32.partialorder %v451, 0.0
  %v486 = vsel %vm484, 1, 0
  %v487 = vsel %vm485, 1, 0
  %v488 = vcvt.s32.f32 %v486
  %v489 = vcvt.s32.f32 %v487
  %v490 = vcvt.s32.f32 %v482
  %v491 = vcvt.s32.f32 %v483
  %v492 = vmul.f32 %v490, %v488
  %v493 = vmul.f32 %v491, %v489
  %v494 = vcvt.s32.f32 %v478
  %v495 = vcvt.s32.f32 %v479
  %v496 = vmul.f32 %v494, %v488
  %v497 = vmul.f32 %v495, %v489
  %v498 = vmul.f32 %v492, 40.0
  %v499 = vmul.f32 %v493, 40.0
  %v500 = vadd.f32 %v498, 0.0
  %v501 = vadd.f32 %v499, 0.0
  %v502 = vmul.f32 %v496, 30.0
  %v503 = vmul.f32 %v497, 30.0
  %v504 = vadd.f32 %v502, 0.0
  %v505 = vadd.f32 %v503, 0.0
  %v506 = vmul.f32 %v500, %v49
  %v507 = vmul.f32 %v501, %v50
  %v508 = vmul.f32 %v504, %v57
  %v509 = vmul.f32 %v505, %v58
  %v510 = vadd.f32 %v506, %v508
  %v511 = vadd.f32 %v507, %v509
  %v512 = vmul.f32 %v446, %v65
  %v513 = vmul.f32 %v451, %v66
  %v514 = vadd.f32 %v510, %v512
  %v515 = vadd.f32 %v511, %v513
  %vm516 = vcmask 367616
  %v517 = vsel %vm516, %v514, 0.0
  %vm518 = vcmask 366592
  %v519 = vsel %vm518, %v515, 0.0
  %v520 = vadd.f32 %v517, %v519
  %v521 = vrot.slane %v520, 4
  %v522 = vadd.f32 %v520, %v521
  %v523 = vrot.slane %v522, 2
  %v524 = vadd.f32 %v522, %v523
  %v525 = vrot.slane %v524, 1
  %v526 = vadd.f32 %v524, %v525
  %s527 = scalar_lea.vmem %s0, 96
  %v528 = vld [vmem:[%s527] sm:$0xff]
  %v529 = vld [vmem:[%s527 + $0x8] sm:$0xff]
  %v530 = vld [vmem:[%s527 + $0x10] sm:$0xff]
  %v531 = vld [vmem:[%s527 + $0x18] sm:$0xff]
  %v532 = vld [vmem:[%s527 + $0x20] sm:$0xff]
  %v533 = vld [vmem:[%s527 + $0x28] sm:$0xff]
  %v534 = vld [vmem:[%s527 + $0x30] sm:$0xff]
  %v535 = vld [vmem:[%s527 + $0x38] sm:$0xff]
  %v536 = vld [vmem:[%s527 + $0x40] sm:$0xff]
  %v537 = vld [vmem:[%s527 + $0x48] sm:$0x7]
  %v538 = vld [vmem:[%s527 + $0x50] sm:$0x7]
  %v539 = vld [vmem:[%s527 + $0x58] sm:$0x7]
  %v541 = vsel %vm94, %v537, 0
  %v544 = vsel %vm94, %v538, 0
  %v547 = vsel %vm94, %v539, 0
  %549 = vmatprep.subr.mxu0 %v529
  %550 = vmatpush1.msra.mxu0 %v528
  %551 = vmatprep.subr.mxu0 %v532
  %552 = vmatpush1.msra.mxu0 %v531
  %553 = vmatprep.subr.mxu0 %v535
  %554 = vmatpush1.msra.mxu0 %v534
  %555 = vmatprep.subr.mxu0 %v544
  %556 = vmatpush1.msra.mxu0 %v541
  %557 = vmatprep.subr.mxu0 0.0
  %558 = vmatpush1.msra.mxu0 0.0
  %559 = vmatprep.subr.mxu0 0.0
  %560 = vmatpush1.msra.mxu0 0.0
  %561 = vmatprep.subr.mxu0 0.0
  %562 = vmatpush1.msra.mxu0 0.0
  %563 = vmatprep.subr.mxu0 0.0
  %564 = vmatpush1.msra.mxu0 0.0
  %565 = vmatprep.subr.mxu0 0.0
  %566 = vmatpush1.msra.mxu0 0.0
  %567 = vmatprep.subr.mxu0 0.0
  %568 = vmatpush1.msra.mxu0 0.0
  %569 = vmatprep.subr.mxu0 0.0
  %570 = vmatpush1.msra.mxu0 0.0
  %571 = vmatprep.subr.mxu0 0.0
  %572 = vmatpush1.msra.mxu0 0.0
  %573 = vmatprep.subr.mxu0 0.0
  %574 = vmatpush1.msra.mxu0 0.0
  %575 = vmatprep.subr.mxu0 0.0
  %576 = vmatpush1.msra.mxu0 0.0
  %577 = vmatprep.subr.mxu0 0.0
  %578 = vmatpush1.msra.mxu0 0.0
  %579 = vmatprep.subr.mxu0 0.0
  %580 = vmatpush1.msra.mxu0 0.0
  %581 = vmatprep.subr.mxu0 0.0
  %582 = vmatpush1.msra.mxu0 0.0
  %583 = vmatprep.subr.mxu0 0.0
  %584 = vmatpush1.msra.mxu0 0.0
  %585 = vmatprep.subr.mxu0 0.0
  %586 = vmatpush1.msra.mxu0 0.0
  %587 = vmatprep.subr.mxu0 0.0
  %588 = vmatpush1.msra.mxu0 0.0
  %589 = vmatprep.subr.mxu0 0.0
  %590 = vmatpush1.msra.mxu0 0.0
  %591 = vmatprep.subr.mxu0 0.0
  %592 = vmatpush1.msra.mxu0 0.0
  %593 = vmatprep.subr.mxu0 0.0
  %594 = vmatpush1.msra.mxu0 0.0
  %595 = vmatprep.subr.mxu0 0.0
  %596 = vmatpush1.msra.mxu0 0.0
  %597 = vmatprep.subr.mxu0 0.0
  %598 = vmatpush1.msra.mxu0 0.0
  %599 = vmatprep.subr.mxu0 0.0
  %600 = vmatpush1.msra.mxu0 0.0
  %601 = vmatprep.subr.mxu0 0.0
  %602 = vmatpush1.msra.mxu0 0.0
  %603 = vmatprep.subr.mxu0 0.0
  %604 = vmatpush1.msra.mxu0 0.0
  %605 = vmatprep.subr.mxu0 0.0
  %606 = vmatpush1.msra.mxu0 0.0
  %607 = vmatprep.subr.mxu0 0.0
  %608 = vmatpush1.msra.mxu0 0.0
  %609 = vmatprep.subr.mxu0 0.0
  %610 = vmatpush1.msra.mxu0 0.0
  %611 = vmatprep.subr.mxu0 0.0
  %612 = vmatpush1.msra.mxu0 0.0
  %613 = vmatprep.mubr.f32.mxu0 0.0
  %614 = vmatmul.mubr.f32.gmra.mrb[0].mxu0 %v90
  %v615 = vpop.f32.mrb[0].mxu0
  %v616 = vadd.f32 %v82, %v615
  %v617 = vpop.f32.mrb[0].mxu0
  %v618 = vadd.f32 %v82, %v617
  %619 = vmatprep.mubr.f32.mxu0 0.0
  %620 = vmatmul.mubr.f32.gmra.mrb[0].mxu0 %v92
  %v621 = vpop.f32.mrb[0].mxu0
  %v622 = vadd.f32 %v87, %v621
  %v623 = vpop.f32.mrb[0].mxu0
  %v624 = vadd.f32 %v87, %v623
  %625 = vdwg.mxu0
  %626 = vmatprep.subr.mxu0 0.0
  %627 = vmatpush1.msra.mxu0 %v530
  %628 = vmatprep.subr.mxu0 0.0
  %629 = vmatpush1.msra.mxu0 %v533
  %630 = vmatprep.subr.mxu0 0.0
  %631 = vmatpush1.msra.mxu0 %v536
  %632 = vmatprep.subr.mxu0 0.0
  %633 = vmatpush1.msra.mxu0 %v547
  %634 = vmatprep.subr.mxu0 0.0
  %635 = vmatpush1.msra.mxu0 0.0
  %636 = vmatprep.subr.mxu0 0.0
  %637 = vmatpush1.msra.mxu0 0.0
  %638 = vmatprep.subr.mxu0 0.0
  %639 = vmatpush1.msra.mxu0 0.0
  %640 = vmatprep.subr.mxu0 0.0
  %641 = vmatpush1.msra.mxu0 0.0
  %642 = vmatprep.subr.mxu0 0.0
  %643 = vmatpush1.msra.mxu0 0.0
  %644 = vmatprep.subr.mxu0 0.0
  %645 = vmatpush1.msra.mxu0 0.0
  %646 = vmatprep.subr.mxu0 0.0
  %647 = vmatpush1.msra.mxu0 0.0
  %648 = vmatprep.subr.mxu0 0.0
  %649 = vmatpush1.msra.mxu0 0.0
  %650 = vmatprep.subr.mxu0 0.0
  %651 = vmatpush1.msra.mxu0 0.0
  %652 = vmatprep.subr.mxu0 0.0
  %653 = vmatpush1.msra.mxu0 0.0
  %654 = vmatprep.subr.mxu0 0.0
  %655 = vmatpush1.msra.mxu0 0.0
  %656 = vmatprep.subr.mxu0 0.0
  %657 = vmatpush1.msra.mxu0 0.0
  %658 = vmatprep.subr.mxu0 0.0
  %659 = vmatpush1.msra.mxu0 0.0
  %660 = vmatprep.subr.mxu0 0.0
  %661 = vmatpush1.msra.mxu0 0.0
  %662 = vmatprep.subr.mxu0 0.0
  %663 = vmatpush1.msra.mxu0 0.0
  %664 = vmatprep.subr.mxu0 0.0
  %665 = vmatpush1.msra.mxu0 0.0
  %666 = vmatprep.subr.mxu0 0.0
  %667 = vmatpush1.msra.mxu0 0.0
  %668 = vmatprep.subr.mxu0 0.0
  %669 = vmatpush1.msra.mxu0 0.0
  %670 = vmatprep.subr.mxu0 0.0
  %671 = vmatpush1.msra.mxu0 0.0
  %672 = vmatprep.subr.mxu0 0.0
  %673 = vmatpush1.msra.mxu0 0.0
  %674 = vmatprep.subr.mxu0 0.0
  %675 = vmatpush1.msra.mxu0 0.0
  %676 = vmatprep.subr.mxu0 0.0
  %677 = vmatpush1.msra.mxu0 0.0
  %678 = vmatprep.subr.mxu0 0.0
  %679 = vmatpush1.msra.mxu0 0.0
  %680 = vmatprep.subr.mxu0 0.0
  %681 = vmatpush1.msra.mxu0 0.0
  %682 = vmatprep.subr.mxu0 0.0
  %683 = vmatpush1.msra.mxu0 0.0
  %684 = vmatprep.subr.mxu0 0.0
  %685 = vmatpush1.msra.mxu0 0.0
  %686 = vmatprep.subr.mxu0 0.0
  %687 = vmatpush1.msra.mxu0 0.0
  %688 = vmatprep.subr.mxu0 0.0
  %689 = vmatpush1.msra.mxu0 0.0
  %690 = vmatprep.mubr.f32.mxu0 0.0
  %691 = vmatmul.mubr.f32.gmra.mrb[0].mxu0 %v90
  %v692 = vpop.f32.mrb[0].mxu0
  %v693 = vadd.f32 %v82, %v692
  %v694 = vpop.f32.mrb[0].mxu0
  %695 = vmatprep.mubr.f32.mxu0 0.0
  %696 = vmatmul.mubr.f32.gmra.mrb[0].mxu0 %v92
  %v697 = vpop.f32.mrb[0].mxu0
  %v698 = vadd.f32 %v87, %v697
  %v699 = vpop.f32.mrb[0].mxu0
  %700 = vdwg.mxu0
  %v701 = vmax.f32 %v616, 0.0
  %v702 = vmax.f32 %v618, 0.0
  %v703 = vmax.f32 %v693, 0.0
  %v704 = vmax.f32 %v622, 0.0
  %v705 = vmax.f32 %v624, 0.0
  %v706 = vmax.f32 %v698, 0.0
  %707 = vmatprep.subr.mxu0 %v702
  %708 = vmatpush1.msra.mxu0 %v701
  %709 = vmatprep.subr.mxu0 %v705
  %710 = vmatpush1.msra.mxu0 %v704
  %711 = vmatprep.subr.mxu0 0.0
  %712 = vmatpush1.msra.mxu0 0.0
  %713 = vmatprep.subr.mxu0 0.0
  %714 = vmatpush1.msra.mxu0 0.0
  %715 = vmatprep.subr.mxu0 0.0
  %716 = vmatpush1.msra.mxu0 0.0
  %717 = vmatprep.subr.mxu0 0.0
  %718 = vmatpush1.msra.mxu0 0.0
  %719 = vmatprep.subr.mxu0 0.0
  %720 = vmatpush1.msra.mxu0 0.0
  %721 = vmatprep.subr.mxu0 0.0
  %722 = vmatpush1.msra.mxu0 0.0
  %723 = vmatprep.subr.mxu0 0.0
  %724 = vmatpush1.msra.mxu0 0.0
  %725 = vmatprep.subr.mxu0 0.0
  %726 = vmatpush1.msra.mxu0 0.0
  %727 = vmatprep.subr.mxu0 0.0
  %728 = vmatpush1.msra.mxu0 0.0
  %729 = vmatprep.subr.mxu0 0.0
  %730 = vmatpush1.msra.mxu0 0.0
  %731 = vmatprep.subr.mxu0 0.0
  %732 = vmatpush1.msra.mxu0 0.0
  %733 = vmatprep.subr.mxu0 0.0
  %734 = vmatpush1.msra.mxu0 0.0
  %735 = vmatprep.subr.mxu0 0.0
  %736 = vmatpush1.msra.mxu0 0.0
  %737 = vmatprep.subr.mxu0 0.0
  %738 = vmatpush1.msra.mxu0 0.0
  %739 = vmatprep.subr.mxu0 0.0
  %740 = vmatpush1.msra.mxu0 0.0
  %741 = vmatprep.subr.mxu0 0.0
  %742 = vmatpush1.msra.mxu0 0.0
  %743 = vmatprep.subr.mxu0 0.0
  %744 = vmatpush1.msra.mxu0 0.0
  %745 = vmatprep.subr.mxu0 0.0
  %746 = vmatpush1.msra.mxu0 0.0
  %747 = vmatprep.subr.mxu0 0.0
  %748 = vmatpush1.msra.mxu0 0.0
  %749 = vmatprep.subr.mxu0 0.0
  %750 = vmatpush1.msra.mxu0 0.0
  %751 = vmatprep.subr.mxu0 0.0
  %752 = vmatpush1.msra.mxu0 0.0
  %753 = vmatprep.subr.mxu0 0.0
  %754 = vmatpush1.msra.mxu0 0.0
  %755 = vmatprep.subr.mxu0 0.0
  %756 = vmatpush1.msra.mxu0 0.0
  %757 = vmatprep.subr.mxu0 0.0
  %758 = vmatpush1.msra.mxu0 0.0
  %759 = vmatprep.subr.mxu0 0.0
  %760 = vmatpush1.msra.mxu0 0.0
  %761 = vmatprep.subr.mxu0 0.0
  %762 = vmatpush1.msra.mxu0 0.0
  %763 = vmatprep.subr.mxu0 0.0
  %764 = vmatpush1.msra.mxu0 0.0
  %765 = vmatprep.subr.mxu0 0.0
  %766 = vmatpush1.msra.mxu0 0.0
  %767 = vmatprep.subr.mxu0 0.0
  %768 = vmatpush1.msra.mxu0 0.0
  %769 = vmatprep.subr.mxu0 0.0
  %770 = vmatpush1.msra.mxu0 0.0
  %771 = vmatprep.mubr.f32.mxu0 0.0
  %772 = vmatmul.mubr.f32.gmra.mrb[0].mxu0 %v273
  %v773 = vpop.f32.mrb[0].mxu0
  %v774 = vadd.f32 %v265, %v773
  %v775 = vpop.f32.mrb[0].mxu0
  %v776 = vadd.f32 %v265, %v775
  %777 = vmatprep.mubr.f32.mxu0 0.0
  %778 = vmatmul.mubr.f32.gmra.mrb[0].mxu0 %v275
  %v779 = vpop.f32.mrb[0].mxu0
  %v780 = vadd.f32 %v270, %v779
  %v781 = vpop.f32.mrb[0].mxu0
  %v782 = vadd.f32 %v270, %v781
  %783 = vdwg.mxu0
  %784 = vmatprep.subr.mxu0 0.0
  %785 = vmatpush1.msra.mxu0 %v703
  %786 = vmatprep.subr.mxu0 0.0
  %787 = vmatpush1.msra.mxu0 %v706
  %788 = vmatprep.subr.mxu0 0.0
  %789 = vmatpush1.msra.mxu0 0.0
  %790 = vmatprep.subr.mxu0 0.0
  %791 = vmatpush1.msra.mxu0 0.0
  %792 = vmatprep.subr.mxu0 0.0
  %793 = vmatpush1.msra.mxu0 0.0
  %794 = vmatprep.subr.mxu0 0.0
  %795 = vmatpush1.msra.mxu0 0.0
  %796 = vmatprep.subr.mxu0 0.0
  %797 = vmatpush1.msra.mxu0 0.0
  %798 = vmatprep.subr.mxu0 0.0
  %799 = vmatpush1.msra.mxu0 0.0
  %800 = vmatprep.subr.mxu0 0.0
  %801 = vmatpush1.msra.mxu0 0.0
  %802 = vmatprep.subr.mxu0 0.0
  %803 = vmatpush1.msra.mxu0 0.0
  %804 = vmatprep.subr.mxu0 0.0
  %805 = vmatpush1.msra.mxu0 0.0
  %806 = vmatprep.subr.mxu0 0.0
  %807 = vmatpush1.msra.mxu0 0.0
  %808 = vmatprep.subr.mxu0 0.0
  %809 = vmatpush1.msra.mxu0 0.0
  %810 = vmatprep.subr.mxu0 0.0
  %811 = vmatpush1.msra.mxu0 0.0
  %812 = vmatprep.subr.mxu0 0.0
  %813 = vmatpush1.msra.mxu0 0.0
  %814 = vmatprep.subr.mxu0 0.0
  %815 = vmatpush1.msra.mxu0 0.0
  %816 = vmatprep.subr.mxu0 0.0
  %817 = vmatpush1.msra.mxu0 0.0
  %818 = vmatprep.subr.mxu0 0.0
  %819 = vmatpush1.msra.mxu0 0.0
  %820 = vmatprep.subr.mxu0 0.0
  %821 = vmatpush1.msra.mxu0 0.0
  %822 = vmatprep.subr.mxu0 0.0
  %823 = vmatpush1.msra.mxu0 0.0
  %824 = vmatprep.subr.mxu0 0.0
  %825 = vmatpush1.msra.mxu0 0.0
  %826 = vmatprep.subr.mxu0 0.0
  %827 = vmatpush1.msra.mxu0 0.0
  %828 = vmatprep.subr.mxu0 0.0
  %829 = vmatpush1.msra.mxu0 0.0
  %830 = vmatprep.subr.mxu0 0.0
  %831 = vmatpush1.msra.mxu0 0.0
  %832 = vmatprep.subr.mxu0 0.0
  %833 = vmatpush1.msra.mxu0 0.0
  %834 = vmatprep.subr.mxu0 0.0
  %835 = vmatpush1.msra.mxu0 0.0
  %836 = vmatprep.subr.mxu0 0.0
  %837 = vmatpush1.msra.mxu0 0.0
  %838 = vmatprep.subr.mxu0 0.0
  %839 = vmatpush1.msra.mxu0 0.0
  %840 = vmatprep.subr.mxu0 0.0
  %841 = vmatpush1.msra.mxu0 0.0
  %842 = vmatprep.subr.mxu0 0.0
  %843 = vmatpush1.msra.mxu0 0.0
  %844 = vmatprep.subr.mxu0 0.0
  %845 = vmatpush1.msra.mxu0 0.0
  %846 = vmatprep.subr.mxu0 0.0
  %847 = vmatpush1.msra.mxu0 0.0
  %848 = vmatprep.mubr.f32.mxu0 0.0
  %849 = vmatmul.mubr.f32.gmra.mrb[0].mxu0 %v273
  %v850 = vpop.f32.mrb[0].mxu0
  %v851 = vadd.f32 %v265, %v850
  %v852 = vpop.f32.mrb[0].mxu0
  %853 = vmatprep.mubr.f32.mxu0 0.0
  %854 = vmatmul.mubr.f32.gmra.mrb[0].mxu0 %v275
  %v855 = vpop.f32.mrb[0].mxu0
  %v856 = vadd.f32 %v270, %v855
  %v857 = vpop.f32.mrb[0].mxu0
  %858 = vdwg.mxu0
  %s859 = scalar_lea.vmem %s3, 48
  %860 = vst [vmem:[%s859] sm:$0xff] %v774
  %861 = vst [vmem:[%s859 + $0x8] sm:$0xff] %v776
  %862 = vst.msk [vmem:[%s859 + $0x10] sm:$0xff] %vm431, %v851
  %863 = vst [vmem:[%s859 + $0x18] sm:$0xff] %v780
  %864 = vst [vmem:[%s859 + $0x20] sm:$0xff] %v782
  %865 = vst.msk [vmem:[%s859 + $0x28] sm:$0xff] %vm431, %v856
  %v866 = vsel %vm36, %v774, -inf
  %v867 = vsel %vm37, %v776, -inf
  %v868 = vsel %vm38, %v851, -inf
  %v869 = vsel %vm36, %v780, -inf
  %v870 = vsel %vm37, %v782, -inf
  %v871 = vsel %vm38, %v856, -inf
  %v872 = vsel %vm431, %v868, -inf
  %v873 = vmax.f32 %v866, %v872
  %v874 = vmax.f32 %v873, %v867
  %875 = vmax.xlane.f32.xlu0 %v874
  %v876 = vpop.xlane.xlu0 %875
  %v877 = vsel %vm431, %v871, -inf
  %v878 = vmax.f32 %v869, %v877
  %v879 = vmax.f32 %v878, %v870
  %880 = vmax.xlane.f32.xlu0 %v879
  %v881 = vpop.xlane.xlu0 %880
  %vm882 = vcmp.eq.f32.partialorder %v866, %v876
  %vm883 = vcmp.eq.f32.partialorder %v867, %v876
  %vm884 = vcmp.eq.f32.partialorder %v868, %v876
  %vm885 = vcmp.eq.f32.partialorder %v869, %v881
  %vm886 = vcmp.eq.f32.partialorder %v870, %v881
  %vm887 = vcmp.eq.f32.partialorder %v871, %v881
  %v888 = vsel %vm882, %v39, 576.0
  %v889 = vsel %vm883, %v40, 576.0
  %v890 = vsel %vm884, %v41, 576.0
  %v891 = vsel %vm885, %v39, 576.0
  %v892 = vsel %vm886, %v40, 576.0
  %v893 = vsel %vm887, %v41, 576.0
  %v894 = vsel %vm431, %v890, inf
  %v895 = vmin.f32 %v888, %v894
  %v896 = vmin.f32 %v895, %v889
  %897 = vmin.xlane.f32.xlu0 %v896
  %v898 = vpop.xlane.xlu0 %897
  %v899 = vsel %vm431, %v893, inf
  %v900 = vmin.f32 %v891, %v899
  %v901 = vmin.f32 %v900, %v892
  %902 = vmin.xlane.f32.xlu0 %v901
  %v903 = vpop.xlane.xlu0 %902
  %v904 = vcvt.f32.s32.to.zero.pseudo %v898
  %v905 = vcvt.f32.s32.to.zero.pseudo %v903
  %v906 = vmul.u32 %v904, 57
  %v907 = vmul.u32 %v905, 57
  %v908 = vshra.s32 %v906, 10
  %v909 = vshra.s32 %v907, 10
  %v910 = vmul.u32 %v908, 18
  %v911 = vmul.u32 %v909, 18
  %v912 = vsub.s32 %v904, %v910
  %v913 = vsub.s32 %v905, %v911
  %vm914 = vcmp.gt.f32.partialorder %v876, 0.0
  %vm915 = vcmp.gt.f32.partialorder %v881, 0.0
  %v916 = vsel %vm914, 1, 0
  %v917 = vsel %vm915, 1, 0
  %v918 = vcvt.s32.f32 %v916
  %v919 = vcvt.s32.f32 %v917
  %v920 = vcvt.s32.f32 %v912
  %v921 = vcvt.s32.f32 %v913
  %v922 = vmul.f32 %v920, %v918
  %v923 = vmul.f32 %v921, %v919
  %v924 = vcvt.s32.f32 %v908
  %v925 = vcvt.s32.f32 %v909
  %v926 = vmul.f32 %v924, %v918
  %v927 = vmul.f32 %v925, %v919
  %v928 = vmul.f32 %v922, 40.0
  %v929 = vmul.f32 %v923, 40.0
  %v930 = vadd.f32 %v928, 0.0
  %v931 = vadd.f32 %v929, 0.0
  %v932 = vmul.f32 %v926, 30.0
  %v933 = vmul.f32 %v927, 30.0
  %v934 = vadd.f32 %v932, 0.0
  %v935 = vadd.f32 %v933, 0.0
  %v936 = vmul.f32 %v930, %v49
  %v937 = vmul.f32 %v931, %v50
  %v938 = vmul.f32 %v934, %v57
  %v939 = vmul.f32 %v935, %v58
  %v940 = vadd.f32 %v936, %v938
  %v941 = vadd.f32 %v937, %v939
  %v942 = vmul.f32 %v876, %v65
  %v943 = vmul.f32 %v881, %v66
  %v944 = vadd.f32 %v940, %v942
  %v945 = vadd.f32 %v941, %v943
  %v946 = vsel %vm516, %v944, 0.0
  %v947 = vsel %vm518, %v945, 0.0
  %v948 = vadd.f32 %v946, %v947
  %v949 = vrot.slane %v948, 4
  %v950 = vadd.f32 %v948, %v949
  %v951 = vrot.slane %v950, 2
  %v952 = vadd.f32 %v950, %v951
  %v953 = vrot.slane %v952, 1
  %v954 = vadd.f32 %v952, %v953
  %vm955 = vcmask 1040384
  %v956 = vsel %vm955, %v526, %v954
  %v957 = vld [vmem:[%s2] sm:$0xff]
  %v958 = vld [vmem:[%s2 + $0x8] sm:$0xff]
  %v959 = vld [vmem:[%s2 + $0x10] sm:$0xff]
  %v960 = vld [vmem:[%s2 + $0x18] sm:$0x3f]
  %v961 = vld [vmem:[%s2 + $0x20] sm:$0xff]
  %v962 = vld [vmem:[%s2 + $0x28] sm:$0xff]
  %v963 = vld [vmem:[%s2 + $0x30] sm:$0xff]
  %v964 = vld [vmem:[%s2 + $0x38] sm:$0xff]
  %v965 = vld [vmem:[%s2 + $0x40] sm:$0xff]
  %v966 = vld [vmem:[%s2 + $0x48] sm:$0xff]
  %v967 = vld [vmem:[%s2 + $0x50] sm:$0xff]
  %v968 = vld [vmem:[%s2 + $0x58] sm:$0xff]
  %v969 = vld [vmem:[%s2 + $0x60] sm:$0xff]
  %v970 = vld [vmem:[%s2 + $0x68] sm:$0xff]
  %v971 = vld [vmem:[%s2 + $0x70] sm:$0xff]
  %v972 = vld [vmem:[%s2 + $0x78] sm:$0xff]
  %v973 = vld [vmem:[%s2 + $0x80] sm:$0xff]
  %v974 = vld [vmem:[%s2 + $0x88] sm:$0xff]
  %v975 = vld [vmem:[%s2 + $0x90] sm:$0xff]
  %v976 = vld [vmem:[%s2 + $0x98] sm:$0xff]
  %v977 = vld [vmem:[%s2 + $0xa0] sm:$0xff]
  %v978 = vld [vmem:[%s2 + $0xa8] sm:$0xff]
  %v979 = vld [vmem:[%s2 + $0xb0] sm:$0xff]
  %v980 = vld [vmem:[%s2 + $0xb8] sm:$0xff]
  %v981 = vld [vmem:[%s2 + $0xc0] sm:$0xff]
  %v982 = vld [vmem:[%s2 + $0xc8] sm:$0xff]
  %v983 = vld [vmem:[%s2 + $0xd0] sm:$0xff]
  %v984 = vld [vmem:[%s2 + $0xd8] sm:$0xff]
  %v985 = vld [vmem:[%s2 + $0xe0] sm:$0xff]
  %v986 = vlaneseq
  %v987 = vshrl.u32 %v986, 7
  %v988 = vsub.s32 6, %v987
  %v989 = vrot.slane %v985, %v988
  %v990 = vsub.f32 %v956, %v989
  %v991 = vadd.f32 %v985, 1e-08
  %v992 = vlaneseq
  %v993 = vshrl.u32 %v992, 7
  %v994 = vsub.s32 7, %v993
  %v995 = vrot.slane %v991, %v994
  %v996 = vrcp.pop %v995
  %v997 = vmul.f32 %v990, %v996
  %v998 = vlaneseq
  %v999 = vshrl.u32 %v998, 7
  %v1000 = vsub.s32 0, %v999
  %v1001 = vrot.slane %v985, %v1000
  %vm1002 = vcmask 244736
  %v1004 = vsel %vm1002, %v997, 0
  %vm1006 = vcmask 1045504
  %v1008 = vsel %vm1006, %v960, 0
  %1010 = vmatprep.subr.mxu0 0.0
  %1011 = vmatpush1.msra.mxu0 %v957
  %1012 = vmatprep.subr.mxu0 0.0
  %1013 = vmatpush1.msra.mxu0 %v958
  %1014 = vmatprep.subr.mxu0 0.0
  %1015 = vmatpush1.msra.mxu0 %v959
  %1016 = vmatprep.subr.mxu0 0.0
  %1017 = vmatpush1.msra.mxu0 %v1008
  %1018 = vmatprep.subr.mxu0 0.0
  %1019 = vmatpush1.msra.mxu0 0.0
  %1020 = vmatprep.subr.mxu0 0.0
  %1021 = vmatpush1.msra.mxu0 0.0
  %1022 = vmatprep.subr.mxu0 0.0
  %1023 = vmatpush1.msra.mxu0 0.0
  %1024 = vmatprep.subr.mxu0 0.0
  %1025 = vmatpush1.msra.mxu0 0.0
  %1026 = vmatprep.subr.mxu0 0.0
  %1027 = vmatpush1.msra.mxu0 0.0
  %1028 = vmatprep.subr.mxu0 0.0
  %1029 = vmatpush1.msra.mxu0 0.0
  %1030 = vmatprep.subr.mxu0 0.0
  %1031 = vmatpush1.msra.mxu0 0.0
  %1032 = vmatprep.subr.mxu0 0.0
  %1033 = vmatpush1.msra.mxu0 0.0
  %1034 = vmatprep.subr.mxu0 0.0
  %1035 = vmatpush1.msra.mxu0 0.0
  %1036 = vmatprep.subr.mxu0 0.0
  %1037 = vmatpush1.msra.mxu0 0.0
  %1038 = vmatprep.subr.mxu0 0.0
  %1039 = vmatpush1.msra.mxu0 0.0
  %1040 = vmatprep.subr.mxu0 0.0
  %1041 = vmatpush1.msra.mxu0 0.0
  %1042 = vmatprep.subr.mxu0 0.0
  %1043 = vmatpush1.msra.mxu0 0.0
  %1044 = vmatprep.subr.mxu0 0.0
  %1045 = vmatpush1.msra.mxu0 0.0
  %1046 = vmatprep.subr.mxu0 0.0
  %1047 = vmatpush1.msra.mxu0 0.0
  %1048 = vmatprep.subr.mxu0 0.0
  %1049 = vmatpush1.msra.mxu0 0.0
  %1050 = vmatprep.subr.mxu0 0.0
  %1051 = vmatpush1.msra.mxu0 0.0
  %1052 = vmatprep.subr.mxu0 0.0
  %1053 = vmatpush1.msra.mxu0 0.0
  %1054 = vmatprep.subr.mxu0 0.0
  %1055 = vmatpush1.msra.mxu0 0.0
  %1056 = vmatprep.subr.mxu0 0.0
  %1057 = vmatpush1.msra.mxu0 0.0
  %1058 = vmatprep.subr.mxu0 0.0
  %1059 = vmatpush1.msra.mxu0 0.0
  %1060 = vmatprep.subr.mxu0 0.0
  %1061 = vmatpush1.msra.mxu0 0.0
  %1062 = vmatprep.subr.mxu0 0.0
  %1063 = vmatpush1.msra.mxu0 0.0
  %1064 = vmatprep.subr.mxu0 0.0
  %1065 = vmatpush1.msra.mxu0 0.0
  %1066 = vmatprep.subr.mxu0 0.0
  %1067 = vmatpush1.msra.mxu0 0.0
  %1068 = vmatprep.subr.mxu0 0.0
  %1069 = vmatpush1.msra.mxu0 0.0
  %1070 = vmatprep.subr.mxu0 0.0
  %1071 = vmatpush1.msra.mxu0 0.0
  %1072 = vmatprep.subr.mxu0 0.0
  %1073 = vmatpush1.msra.mxu0 0.0
  %1074 = vmatprep.mubr.f32.mxu0 0.0
  %1075 = vmatmul.mubr.f32.gmra.mrb[0].mxu0 %v1004
  %v1076 = vpop.f32.mrb[0].mxu0
  %v1077 = vadd.f32 %v1001, %v1076
  %v1078 = vpop.f32.mrb[0].mxu0
  %1079 = vdwg.mxu0
  %v1080 = vmax.f32 %v1077, 0.0
  %v1081 = vlaneseq
  %v1082 = vshrl.u32 %v1081, 7
  %v1083 = vsub.s32 1, %v1082
  %v1084 = vrot.slane %v985, %v1083
  %vm1085 = vcmask 523264
  %v1087 = vsel %vm1085, %v1080, 0
  %1089 = vmatprep.subr.mxu0 0.0
  %1090 = vmatpush1.msra.mxu0 %v961
  %1091 = vmatprep.subr.mxu0 0.0
  %1092 = vmatpush1.msra.mxu0 %v962
  %1093 = vmatprep.subr.mxu0 0.0
  %1094 = vmatpush1.msra.mxu0 %v963
  %1095 = vmatprep.subr.mxu0 0.0
  %1096 = vmatpush1.msra.mxu0 %v964
  %1097 = vmatprep.subr.mxu0 0.0
  %1098 = vmatpush1.msra.mxu0 %v965
  %1099 = vmatprep.subr.mxu0 0.0
  %1100 = vmatpush1.msra.mxu0 %v966
  %1101 = vmatprep.subr.mxu0 0.0
  %1102 = vmatpush1.msra.mxu0 %v967
  %1103 = vmatprep.subr.mxu0 0.0
  %1104 = vmatpush1.msra.mxu0 %v968
  %1105 = vmatprep.subr.mxu0 0.0
  %1106 = vmatpush1.msra.mxu0 0.0
  %1107 = vmatprep.subr.mxu0 0.0
  %1108 = vmatpush1.msra.mxu0 0.0
  %1109 = vmatprep.subr.mxu0 0.0
  %1110 = vmatpush1.msra.mxu0 0.0
  %1111 = vmatprep.subr.mxu0 0.0
  %1112 = vmatpush1.msra.mxu0 0.0
  %1113 = vmatprep.subr.mxu0 0.0
  %1114 = vmatpush1.msra.mxu0 0.0
  %1115 = vmatprep.subr.mxu0 0.0
  %1116 = vmatpush1.msra.mxu0 0.0
  %1117 = vmatprep.subr.mxu0 0.0
  %1118 = vmatpush1.msra.mxu0 0.0
  %1119 = vmatprep.subr.mxu0 0.0
  %1120 = vmatpush1.msra.mxu0 0.0
  %1121 = vmatprep.subr.mxu0 0.0
  %1122 = vmatpush1.msra.mxu0 0.0
  %1123 = vmatprep.subr.mxu0 0.0
  %1124 = vmatpush1.msra.mxu0 0.0
  %1125 = vmatprep.subr.mxu0 0.0
  %1126 = vmatpush1.msra.mxu0 0.0
  %1127 = vmatprep.subr.mxu0 0.0
  %1128 = vmatpush1.msra.mxu0 0.0
  %1129 = vmatprep.subr.mxu0 0.0
  %1130 = vmatpush1.msra.mxu0 0.0
  %1131 = vmatprep.subr.mxu0 0.0
  %1132 = vmatpush1.msra.mxu0 0.0
  %1133 = vmatprep.subr.mxu0 0.0
  %1134 = vmatpush1.msra.mxu0 0.0
  %1135 = vmatprep.subr.mxu0 0.0
  %1136 = vmatpush1.msra.mxu0 0.0
  %1137 = vmatprep.subr.mxu0 0.0
  %1138 = vmatpush1.msra.mxu0 0.0
  %1139 = vmatprep.subr.mxu0 0.0
  %1140 = vmatpush1.msra.mxu0 0.0
  %1141 = vmatprep.subr.mxu0 0.0
  %1142 = vmatpush1.msra.mxu0 0.0
  %1143 = vmatprep.subr.mxu0 0.0
  %1144 = vmatpush1.msra.mxu0 0.0
  %1145 = vmatprep.subr.mxu0 0.0
  %1146 = vmatpush1.msra.mxu0 0.0
  %1147 = vmatprep.subr.mxu0 0.0
  %1148 = vmatpush1.msra.mxu0 0.0
  %1149 = vmatprep.subr.mxu0 0.0
  %1150 = vmatpush1.msra.mxu0 0.0
  %1151 = vmatprep.subr.mxu0 0.0
  %1152 = vmatpush1.msra.mxu0 0.0
  %1153 = vmatprep.mubr.f32.mxu0 0.0
  %1154 = vmatmul.mubr.f32.gmra.mrb[0].mxu0 %v1087
  %v1155 = vpop.f32.mrb[0].mxu0
  %v1156 = vadd.f32 %v1084, %v1155
  %v1157 = vpop.f32.mrb[0].mxu0
  %1158 = vdwg.mxu0
  %v1159 = vmax.f32 %v1156, 0.0
  %v1160 = vlaneseq
  %v1161 = vshrl.u32 %v1160, 7
  %v1162 = vsub.s32 2, %v1161
  %v1163 = vrot.slane %v985, %v1162
  %v1165 = vsel %vm1085, %v1159, 0
  %1167 = vmatprep.subr.mxu0 0.0
  %1168 = vmatpush1.msra.mxu0 %v969
  %1169 = vmatprep.subr.mxu0 0.0
  %1170 = vmatpush1.msra.mxu0 %v970
  %1171 = vmatprep.subr.mxu0 0.0
  %1172 = vmatpush1.msra.mxu0 %v971
  %1173 = vmatprep.subr.mxu0 0.0
  %1174 = vmatpush1.msra.mxu0 %v972
  %1175 = vmatprep.subr.mxu0 0.0
  %1176 = vmatpush1.msra.mxu0 %v973
  %1177 = vmatprep.subr.mxu0 0.0
  %1178 = vmatpush1.msra.mxu0 %v974
  %1179 = vmatprep.subr.mxu0 0.0
  %1180 = vmatpush1.msra.mxu0 %v975
  %1181 = vmatprep.subr.mxu0 0.0
  %1182 = vmatpush1.msra.mxu0 %v976
  %1183 = vmatprep.subr.mxu0 0.0
  %1184 = vmatpush1.msra.mxu0 0.0
  %1185 = vmatprep.subr.mxu0 0.0
  %1186 = vmatpush1.msra.mxu0 0.0
  %1187 = vmatprep.subr.mxu0 0.0
  %1188 = vmatpush1.msra.mxu0 0.0
  %1189 = vmatprep.subr.mxu0 0.0
  %1190 = vmatpush1.msra.mxu0 0.0
  %1191 = vmatprep.subr.mxu0 0.0
  %1192 = vmatpush1.msra.mxu0 0.0
  %1193 = vmatprep.subr.mxu0 0.0
  %1194 = vmatpush1.msra.mxu0 0.0
  %1195 = vmatprep.subr.mxu0 0.0
  %1196 = vmatpush1.msra.mxu0 0.0
  %1197 = vmatprep.subr.mxu0 0.0
  %1198 = vmatpush1.msra.mxu0 0.0
  %1199 = vmatprep.subr.mxu0 0.0
  %1200 = vmatpush1.msra.mxu0 0.0
  %1201 = vmatprep.subr.mxu0 0.0
  %1202 = vmatpush1.msra.mxu0 0.0
  %1203 = vmatprep.subr.mxu0 0.0
  %1204 = vmatpush1.msra.mxu0 0.0
  %1205 = vmatprep.subr.mxu0 0.0
  %1206 = vmatpush1.msra.mxu0 0.0
  %1207 = vmatprep.subr.mxu0 0.0
  %1208 = vmatpush1.msra.mxu0 0.0
  %1209 = vmatprep.subr.mxu0 0.0
  %1210 = vmatpush1.msra.mxu0 0.0
  %1211 = vmatprep.subr.mxu0 0.0
  %1212 = vmatpush1.msra.mxu0 0.0
  %1213 = vmatprep.subr.mxu0 0.0
  %1214 = vmatpush1.msra.mxu0 0.0
  %1215 = vmatprep.subr.mxu0 0.0
  %1216 = vmatpush1.msra.mxu0 0.0
  %1217 = vmatprep.subr.mxu0 0.0
  %1218 = vmatpush1.msra.mxu0 0.0
  %1219 = vmatprep.subr.mxu0 0.0
  %1220 = vmatpush1.msra.mxu0 0.0
  %1221 = vmatprep.subr.mxu0 0.0
  %1222 = vmatpush1.msra.mxu0 0.0
  %1223 = vmatprep.subr.mxu0 0.0
  %1224 = vmatpush1.msra.mxu0 0.0
  %1225 = vmatprep.subr.mxu0 0.0
  %1226 = vmatpush1.msra.mxu0 0.0
  %1227 = vmatprep.subr.mxu0 0.0
  %1228 = vmatpush1.msra.mxu0 0.0
  %1229 = vmatprep.subr.mxu0 0.0
  %1230 = vmatpush1.msra.mxu0 0.0
  %1231 = vmatprep.mubr.f32.mxu0 0.0
  %1232 = vmatmul.mubr.f32.gmra.mrb[0].mxu0 %v1165
  %v1233 = vpop.f32.mrb[0].mxu0
  %v1234 = vadd.f32 %v1163, %v1233
  %v1235 = vpop.f32.mrb[0].mxu0
  %1236 = vdwg.mxu0
  %v1237 = vmax.f32 %v1234, 0.0
  %v1238 = vadd.f32 %v1080, %v1237
  %v1239 = vlaneseq
  %v1240 = vshrl.u32 %v1239, 7
  %v1241 = vsub.s32 3, %v1240
  %v1242 = vrot.slane %v985, %v1241
  %v1244 = vsel %vm1085, %v1238, 0
  %1246 = vmatprep.subr.mxu0 0.0
  %1247 = vmatpush1.msra.mxu0 %v977
  %1248 = vmatprep.subr.mxu0 0.0
  %1249 = vmatpush1.msra.mxu0 %v978
  %1250 = vmatprep.subr.mxu0 0.0
  %1251 = vmatpush1.msra.mxu0 %v979
  %1252 = vmatprep.subr.mxu0 0.0
  %1253 = vmatpush1.msra.mxu0 %v980
  %1254 = vmatprep.subr.mxu0 0.0
  %1255 = vmatpush1.msra.mxu0 %v981
  %1256 = vmatprep.subr.mxu0 0.0
  %1257 = vmatpush1.msra.mxu0 %v982
  %1258 = vmatprep.subr.mxu0 0.0
  %1259 = vmatpush1.msra.mxu0 %v983
  %1260 = vmatprep.subr.mxu0 0.0
  %1261 = vmatpush1.msra.mxu0 %v984
  %1262 = vmatprep.subr.mxu0 0.0
  %1263 = vmatpush1.msra.mxu0 0.0
  %1264 = vmatprep.subr.mxu0 0.0
  %1265 = vmatpush1.msra.mxu0 0.0
  %1266 = vmatprep.subr.mxu0 0.0
  %1267 = vmatpush1.msra.mxu0 0.0
  %1268 = vmatprep.subr.mxu0 0.0
  %1269 = vmatpush1.msra.mxu0 0.0
  %1270 = vmatprep.subr.mxu0 0.0
  %1271 = vmatpush1.msra.mxu0 0.0
  %1272 = vmatprep.subr.mxu0 0.0
  %1273 = vmatpush1.msra.mxu0 0.0
  %1274 = vmatprep.subr.mxu0 0.0
  %1275 = vmatpush1.msra.mxu0 0.0
  %1276 = vmatprep.subr.mxu0 0.0
  %1277 = vmatpush1.msra.mxu0 0.0
  %1278 = vmatprep.subr.mxu0 0.0
  %1279 = vmatpush1.msra.mxu0 0.0
  %1280 = vmatprep.subr.mxu0 0.0
  %1281 = vmatpush1.msra.mxu0 0.0
  %1282 = vmatprep.subr.mxu0 0.0
  %1283 = vmatpush1.msra.mxu0 0.0
  %1284 = vmatprep.subr.mxu0 0.0
  %1285 = vmatpush1.msra.mxu0 0.0
  %1286 = vmatprep.subr.mxu0 0.0
  %1287 = vmatpush1.msra.mxu0 0.0
  %1288 = vmatprep.subr.mxu0 0.0
  %1289 = vmatpush1.msra.mxu0 0.0
  %1290 = vmatprep.subr.mxu0 0.0
  %1291 = vmatpush1.msra.mxu0 0.0
  %1292 = vmatprep.subr.mxu0 0.0
  %1293 = vmatpush1.msra.mxu0 0.0
  %1294 = vmatprep.subr.mxu0 0.0
  %1295 = vmatpush1.msra.mxu0 0.0
  %1296 = vmatprep.subr.mxu0 0.0
  %1297 = vmatpush1.msra.mxu0 0.0
  %1298 = vmatprep.subr.mxu0 0.0
  %1299 = vmatpush1.msra.mxu0 0.0
  %1300 = vmatprep.subr.mxu0 0.0
  %1301 = vmatpush1.msra.mxu0 0.0
  %1302 = vmatprep.subr.mxu0 0.0
  %1303 = vmatpush1.msra.mxu0 0.0
  %1304 = vmatprep.subr.mxu0 0.0
  %1305 = vmatpush1.msra.mxu0 0.0
  %1306 = vmatprep.subr.mxu0 0.0
  %1307 = vmatpush1.msra.mxu0 0.0
  %1308 = vmatprep.subr.mxu0 0.0
  %1309 = vmatpush1.msra.mxu0 0.0
  %1310 = vmatprep.mubr.f32.mxu0 0.0
  %1311 = vmatmul.mubr.f32.gmra.mrb[0].mxu0 %v1244
  %v1312 = vpop.f32.mrb[0].mxu0
  %v1313 = vadd.f32 %v1242, %v1312
  %v1314 = vpop.f32.mrb[0].mxu0
  %1315 = vdwg.mxu0
  %v1316 = vlaneseq
  %v1317 = vshrl.u32 %v1316, 7
  %v1318 = vsub.s32 5, %v1317
  %v1319 = vrot.slane %v985, %v1318
  %v1320 = vmul.f32 %v1313, %v1319
  %v1321 = vlaneseq
  %v1322 = vshrl.u32 %v1321, 7
  %v1323 = vsub.s32 4, %v1322
  %v1324 = vrot.slane %v985, %v1323
  %v1325 = vadd.f32 %v1320, %v1324
  %1327 = vrot.lane.b32.xlu0 %v1325, 45
  %v1328 = vpop.permute.xlu0 %1327
  %v1330 = vsel %vm516, %v956, %v1328
  %vm1331 = vcmask 736256
  %v1332 = vsel %vm1331, %v1330, 0.0
  %1333 = vst [vmem:[%s4] sm:$0x3] %v1332
  // Predicated region
  $region14: #{hpe_net_forward.1} parent=0 // pred_check
    _
  $region15: #{hpe_net_forward.1} parent=0 // pred_check_branch
    %1335 = sbr.rel (0) target = $region17
  $region16: #{hpe_net_forward.1} parent=0 // pred_region
    _
  $region17: #{hpe_net_forward.1} parent=0 // pred_fallthru
    _
  // Predicated region
  $region18: #{hpe_net_forward.1} parent=0 // pred_check
    _
  $region19: #{hpe_net_forward.1} parent=0 // pred_check_branch
    %1337 = sbr.rel (0) target = $region21
  $region20: #{hpe_net_forward.1} parent=0 // pred_region
    _
  $region21: #{hpe_net_forward.1} parent=0 // pred_fallthru
    _
  // Predicated region
  $region22: #{hpe_net_forward.1} parent=0 // pred_check
    _
  $region23: #{hpe_net_forward.1} parent=0 // pred_check_branch
    %1339 = sbr.rel (0) target = $region25
  $region24: #{hpe_net_forward.1} parent=0 // pred_region
    _
  $region25: #{hpe_net_forward.1} parent=0 // pred_fallthru
    _
  // Predicated region
  $region26: #{hpe_net_forward.1} parent=0 // pred_check
    _
  $region27: #{hpe_net_forward.1} parent=0 // pred_check_branch
    %1341 = sbr.rel (0) target = $region29
  $region28: #{hpe_net_forward.1} parent=0 // pred_region
    _
  $region29: #{hpe_net_forward.1} parent=0 // pred_fallthru
    _

</llo_original>
